<compile_context>
chip_gen: v5e
topology: v5e:2x2
jax: 0.10.0
libtpu: 0.0.40
codegen_flags: <defaults>
</compile_context>

<pallas_src>
import functools

import jax
import jax.numpy as jnp
from jax import lax
from jax.experimental import pallas as pl
from jax.experimental.pallas import tpu as pltpu


def _round_up(x, m):
    return (x + m - 1) // m * m


def residual_block_kernel(x_ref, top_ref, bot_ref, w1_ref, b1_ref, w2_ref,
                          b2_ref, o_ref, xpad_ref, slab_ref):
    """One (batch, row-tile) step.

    x_ref   : (1, tile_h, W, C)  f32   raw input rows of this tile (NHWC)
    top_ref : (1, 1, W, C)       f32   row above the tile (clamped; masked)
    bot_ref : (1, 1, W, C)       f32   row below the tile (clamped; masked)
    w1_ref  : (3, 3C, C)         bf16  conv1 weights, kw folded into K
    b1_ref  : (1, C)             f32   conv1 bias
    w2_ref  : (C, C)             bf16  conv2 (1x1) weights (Cin, Cout)
    b2_ref  : (1, C)             f32   conv2 bias
    o_ref   : (1, tile_h, W, C)  f32   output tile
    xpad_ref: (1, tile_h+2, Wp, C)  bf16 scratch: relu(x) with fused zero halo
    slab_ref: (1, tile_h+2, W, 3C)  bf16 scratch: kw-folded im2col slab
    """
    _, tile_h, W, C = x_ref.shape
    i = pl.program_id(1)
    n_h = pl.num_programs(1)
    f32 = jnp.float32
    bf16 = jnp.bfloat16

    # ---- relu(x) with a fused zero halo, stored bf16 (MXU operand dtype) ----
    # Zero columns are rewritten every step: under megacore grid sharding each
    # core has its own scratch + first step, so a program_id==0 guard is unsafe.
    zcol = jnp.zeros((1, tile_h + 2, 1, C), bf16)
    xpad_ref[:, :, 0:1, :] = zcol
    xpad_ref[:, :, W + 1:W + 2, :] = zcol
    xpad_ref[:, 1:tile_h + 1, 1:W + 1, :] = (
        jnp.maximum(x_ref[...], 0.0).astype(bf16))
    # halo rows from neighbouring tiles; zero at the image top / bottom
    top = jnp.maximum(top_ref[...], 0.0)
    bot = jnp.maximum(bot_ref[...], 0.0)
    xpad_ref[:, 0:1, 1:W + 1, :] = jnp.where(i > 0, top, 0.0).astype(bf16)
    xpad_ref[:, tile_h + 1:tile_h + 2, 1:W + 1, :] = (
        jnp.where(i < n_h - 1, bot, 0.0).astype(bf16))

    # ---- kw-folded im2col slab: slab[..., w, dw*C + ci] = xpad[..., w+dw, ci]
    # 3 sublane-shift sites (vs 9 shifted tap loads); the dh offsets below are
    # free row-offset slices on the slab's third-from-last axis.
    slab_ref[:, :, :, 0 * C:1 * C] = xpad_ref[:, :, 0:W, :]
    slab_ref[:, :, :, 1 * C:2 * C] = xpad_ref[:, :, 1:W + 1, :]
    slab_ref[:, :, :, 2 * C:3 * C] = xpad_ref[:, :, 2:W + 2, :]

    # ---- conv1 (3x3, pad 1): 3 MXU passes, K = 3C, bf16 operands, f32 acc ---
    # accumulator seeded with the broadcast bias (hoisted out of the loop)
    acc = jnp.broadcast_to(b1_ref[...], (1, tile_h, W, C)).astype(f32)
    for dh in range(3):
        acc = acc + jnp.einsum(
            'bhwk,kd->bhwd',
            slab_ref[:, dh:dh + tile_h, :, :], w1_ref[dh],
            preferred_element_type=f32)

    # ---- relu -> conv2 (1x1, bf16 operands) -> bias -> residual add --------
    h1 = jnp.maximum(acc, 0.0).astype(bf16)
    out = jnp.einsum('bhwc,cd->bhwd', h1, w2_ref[...],
                     preferred_element_type=f32)
    out = out + b2_ref[...] + x_ref[...]            # residual uses raw f32 x
    o_ref[...] = out.astype(o_ref.dtype)


def _vmem_footprint(tile_h, W, C):
    """Approximate per-step VMEM bytes for the chosen tiling."""
    x_tile = tile_h * W * C * 4                   # f32 input tile
    out_tile = tile_h * W * C * 4                 # f32 output tile
    halo = W * C * 4                              # one f32 halo row
    w_bytes = (9 * C * C + C * C) * 2 + 2 * C * 4  # bf16 weights + f32 biases
    xpad = (tile_h + 2) * _round_up(W + 2, 8) * C * 2
    slab = (tile_h + 2) * W * 3 * C * 2
    acc_tmp = tile_h * W * C * 4                  # f32 accumulator temp
    # streamed operands are double-buffered by the auto-pipeline; resident
    # weights conservatively counted twice (see pl.Buffered(1) TODO above).
    return (2 * (x_tile + out_tile + 2 * halo) + 2 * w_bytes
            + xpad + slab + acc_tmp)


def _choose_tile_h(H, W, C, budget_bytes):
    """Largest divisor of H (<=64 rows) whose VMEM footprint fits the budget."""
    best = 1
    for th in range(1, H + 1):
        if H % th == 0 and th <= 64 and _vmem_footprint(th, W, C) <= budget_bytes:
            best = th
    return best


def residual_block_nhwc(x_nhwc, w1_hwio, b1, w2_io, b2, *, tile_h=None):
    """NHWC-native entry point (channels on the lane dim, no layout transposes).
    w1_hwio: (3, 3, Cin, Cout), w2_io: (Cin, Cout)."""
    B, H, W, C = x_nhwc.shape
    budget = 40 * 2**20                     # headroom inside v7x's 64 MiB VMEM
    if tile_h is None:
        tile_h = _choose_tile_h(H, W, C, budget)
    assert H % tile_h == 0, "tile_h must divide H"
    n_h = H // tile_h
    W_pad = _round_up(W + 2, 8)

    x = x_nhwc.astype(jnp.float32)
    # conv1 weights with kw folded into the contraction: (kh, kw*Cin, Cout), bf16
    w1k = w1_hwio.reshape(3, 3 * C, C).astype(jnp.bfloat16)
    w2k = w2_io.astype(jnp.bfloat16)
    b1k = b1.reshape(1, C).astype(jnp.float32)
    b2k = b2.reshape(1, C).astype(jnp.float32)

    vmem_limit = int(min(64 * 2**20,
                         max(32 * 2**20,
                             _vmem_footprint(tile_h, W, C) + 8 * 2**20)))

    # input tile + its two halo rows (clamped at the boundary, masked in-kernel)
    x_spec = pl.BlockSpec((1, tile_h, W, C), lambda b, i: (b, i, 0, 0))
    top_spec = pl.BlockSpec(
        (1, 1, W, C), lambda b, i: (b, jnp.maximum(i * tile_h - 1, 0), 0, 0))
    bot_spec = pl.BlockSpec(
        (1, 1, W, C), lambda b, i: (b, jnp.minimum((i + 1) * tile_h, H - 1), 0, 0))
    # weights / biases: constant index_map -> fetched once, resident in VMEM
    w1_spec = pl.BlockSpec((3, 3 * C, C), lambda b, i: (0, 0, 0))
    b1_spec = pl.BlockSpec((1, C), lambda b, i: (0, 0))
    w2_spec = pl.BlockSpec((C, C), lambda b, i: (0, 0))
    b2_spec = pl.BlockSpec((1, C), lambda b, i: (0, 0))

    return pl.pallas_call(
        residual_block_kernel,
        out_shape=jax.ShapeDtypeStruct((B, H, W, C), jnp.float32),
        grid=(B, n_h),
        in_specs=[x_spec, top_spec, bot_spec, w1_spec, b1_spec, w2_spec, b2_spec],
        out_specs=pl.BlockSpec((1, tile_h, W, C), lambda b, i: (b, i, 0, 0)),
        scratch_shapes=[
            pltpu.VMEM((1, tile_h + 2, W_pad, C), jnp.bfloat16),    # xpad
            pltpu.VMEM((1, tile_h + 2, W, 3 * C), jnp.bfloat16),    # im2col slab
        ],
        compiler_params=pltpu.CompilerParams(
            dimension_semantics=("parallel", "parallel"),
            vmem_limit_bytes=vmem_limit),
    )(x, x, x, w1k, b1k, w2k, b2k)


def residual_block(x_nchw, w1_oihw, b1, w2_oihw, b2, *, tile_h=None):
    """PyTorch-layout wrapper: x (B,C,H,W); w1 (C,C,3,3); w2 (C,C,1,1).
    TODO(synk): keep the surrounding model NHWC end-to-end (use
    residual_block_nhwc directly) so these two transposes — two extra full HBM
    passes over the activations — disappear."""
    B, C, H, W = x_nchw.shape
    x = jnp.transpose(x_nchw, (0, 2, 3, 1))                    # NCHW -> NHWC
    w1_hwio = jnp.transpose(w1_oihw, (2, 3, 1, 0))             # (3,3,Cin,Cout)
    w2_io = jnp.transpose(w2_oihw[:, :, 0, 0], (1, 0))         # (Cin,Cout)
    out = residual_block_nhwc(x, w1_hwio, b1, w2_io, b2, tile_h=tile_h)
    return jnp.transpose(out, (0, 3, 1, 2))                    # back to NCHW


def ref_forward(x, w1, b1, w2, b2):
    """Pure-JAX f32 reference (NCHW / OIHW), matches PyTorch forward semantics."""
    a = jnp.maximum(x, 0.0)
    y = lax.conv_general_dilated(a, w1, (1, 1), ((1, 1), (1, 1)),
                                 dimension_numbers=('NCHW', 'OIHW', 'NCHW'))
    y = y + b1[None, :, None, None]
    y = jnp.maximum(y, 0.0)
    y = lax.conv_general_dilated(y, w2, (1, 1), ((0, 0), (0, 0)),
                                 dimension_numbers=('NCHW', 'OIHW', 'NCHW'))
    y = y + b2[None, :, None, None]
    return y + x


if __name__ == "__main__":
    B, C, H, W = 2, 4, 16, 16       # hidden_size = 4 (tiny test shape)
    key = jax.random.PRNGKey(0)
    kx, k1, kb1, k2, kb2 = jax.random.split(key, 5)

    x = jax.random.normal(kx, (B, C, H, W), dtype=jnp.float32)

    # Deterministic params (same shapes as nn.Conv2d; kaiming-uniform-ish bounds)
    bound1 = 1.0 / (C * 3 * 3) ** 0.5
    w1 = jax.random.uniform(k1, (C, C, 3, 3), jnp.float32, -bound1, bound1)
    b1 = jax.random.uniform(kb1, (C,), jnp.float32, -bound1, bound1)
    bound2 = 1.0 / (C * 1 * 1) ** 0.5
    w2 = jax.random.uniform(k2, (C, C, 1, 1), jnp.float32, -bound2, bound2)
    b2 = jax.random.uniform(kb2, (C,), jnp.float32, -bound2, bound2)

    # tile_h=8 -> 2 row-tiles per image: exercises boundary + interior halos
    fwd = jax.jit(functools.partial(residual_block, tile_h=8))
    out = jax.block_until_ready(fwd(x, w1, b1, w2, b2))
    ref = jax.block_until_ready(ref_forward(x, w1, b1, w2, b2))

    assert out.shape == (B, C, H, W)
    # bf16 MXU operands (f32 accumulation) -> tolerance relaxed vs f32 reference
    assert jnp.allclose(out, ref, atol=5e-2, rtol=5e-2), "mismatch vs reference"
    print("KERNEL_OK")
</pallas_src>

<mosaic_0001>
module attributes {stable_mosaic.version = 11 : i64} {
  func.func @residual_block_kernel(%arg0: i32, %arg1: i32, %arg2: memref<1x8x16x4xf32, #tpu.memory_space<vmem>>, %arg3: memref<1x1x16x4xf32, #tpu.memory_space<vmem>>, %arg4: memref<1x1x16x4xf32, #tpu.memory_space<vmem>>, %arg5: memref<3x12x4xbf16, #tpu.memory_space<vmem>>, %arg6: memref<1x4xf32, #tpu.memory_space<vmem>>, %arg7: memref<4x4xbf16, #tpu.memory_space<vmem>>, %arg8: memref<1x4xf32, #tpu.memory_space<vmem>>, %arg9: memref<1x8x16x4xf32, #tpu.memory_space<vmem>>, %arg10: memref<1x10x24x4xbf16, #tpu.memory_space<vmem>>, %arg11: memref<1x10x16x12xbf16, #tpu.memory_space<vmem>>) attributes {dimension_semantics = [#tpu.dimension_semantics<parallel>, #tpu.dimension_semantics<parallel>], iteration_bounds = array<i64: 2, 2>, scalar_prefetch = 0 : i64, scratch_operands = 2 : i64, tpu.core_type = #tpu.core_type<tc>, window_params = [{transform_indices = @transform_0, window_bounds = array<i64: 1, 8, 16, 4>}, {transform_indices = @transform_1, window_bounds = array<i64: 1, 1, 16, 4>}, {transform_indices = @transform_2, window_bounds = array<i64: 1, 1, 16, 4>}, {pipeline_mode = #tpu.pipeline_mode<synchronous>, transform_indices = @transform_3, window_bounds = array<i64: 3, 12, 4>}, {pipeline_mode = #tpu.pipeline_mode<synchronous>, transform_indices = @transform_4, window_bounds = array<i64: 1, 4>}, {pipeline_mode = #tpu.pipeline_mode<synchronous>, transform_indices = @transform_5, window_bounds = array<i64: 4, 4>}, {pipeline_mode = #tpu.pipeline_mode<synchronous>, transform_indices = @transform_6, window_bounds = array<i64: 1, 4>}, {transform_indices = @transform_7, window_bounds = array<i64: 1, 8, 16, 4>}]} {
    %cst = arith.constant 0.000000e+00 : bf16
    %0 = vector.broadcast %cst : bf16 to vector<1x10x1x4xbf16>
    %c0 = arith.constant 0 : index
    %c0_0 = arith.constant 0 : index
    %c0_1 = arith.constant 0 : index
    %c0_2 = arith.constant 0 : index
    %1 = vector.load %arg10[%c0, %c0_0, %c0_1, %c0_2] : memref<1x10x24x4xbf16, #tpu.memory_space<vmem>>, vector<1x10x1x4xbf16>
    tpu.vector_store %arg10[%c0, %c0_0, %c0_1, %c0_2], %0 {strides = array<i32>} : memref<1x10x24x4xbf16, #tpu.memory_space<vmem>>, vector<1x10x1x4xbf16>,
    %c0_3 = arith.constant 0 : index
    %c0_4 = arith.constant 0 : index
    %c17 = arith.constant 17 : index
    %c0_5 = arith.constant 0 : index
    %2 = vector.load %arg10[%c0_3, %c0_4, %c17, %c0_5] : memref<1x10x24x4xbf16, #tpu.memory_space<vmem>>, vector<1x10x1x4xbf16>
    tpu.vector_store %arg10[%c0_3, %c0_4, %c17, %c0_5], %0 {strides = array<i32>} : memref<1x10x24x4xbf16, #tpu.memory_space<vmem>>, vector<1x10x1x4xbf16>,
    %c0_6 = arith.constant 0 : index
    %c0_7 = arith.constant 0 : index
    %c0_8 = arith.constant 0 : index
    %c0_9 = arith.constant 0 : index
    %3 = vector.load %arg2[%c0_6, %c0_7, %c0_8, %c0_9] : memref<1x8x16x4xf32, #tpu.memory_space<vmem>>, vector<1x8x16x4xf32>
    %cst_10 = arith.constant 0.000000e+00 : f32
    %4 = vector.broadcast %cst_10 : f32 to vector<1x8x16x4xf32>
    %5 = arith.maximumf %3, %4 : vector<1x8x16x4xf32>
    %6 = arith.truncf %5 : vector<1x8x16x4xf32> to vector<1x8x16x4xbf16>
    %c0_11 = arith.constant 0 : index
    %c1 = arith.constant 1 : index
    %c1_12 = arith.constant 1 : index
    %c0_13 = arith.constant 0 : index
    %7 = vector.load %arg10[%c0_11, %c1, %c1_12, %c0_13] : memref<1x10x24x4xbf16, #tpu.memory_space<vmem>>, vector<1x8x16x4xbf16>
    tpu.vector_store %arg10[%c0_11, %c1, %c1_12, %c0_13], %6 {strides = array<i32>} : memref<1x10x24x4xbf16, #tpu.memory_space<vmem>>, vector<1x8x16x4xbf16>,
    %c0_14 = arith.constant 0 : index
    %c0_15 = arith.constant 0 : index
    %c0_16 = arith.constant 0 : index
    %c0_17 = arith.constant 0 : index
    %8 = vector.load %arg3[%c0_14, %c0_15, %c0_16, %c0_17] : memref<1x1x16x4xf32, #tpu.memory_space<vmem>>, vector<1x1x16x4xf32>
    %cst_18 = arith.constant 0.000000e+00 : f32
    %9 = vector.broadcast %cst_18 : f32 to vector<1x1x16x4xf32>
    %10 = arith.maximumf %8, %9 : vector<1x1x16x4xf32>
    %c0_19 = arith.constant 0 : index
    %c0_20 = arith.constant 0 : index
    %c0_21 = arith.constant 0 : index
    %c0_22 = arith.constant 0 : index
    %11 = vector.load %arg4[%c0_19, %c0_20, %c0_21, %c0_22] : memref<1x1x16x4xf32, #tpu.memory_space<vmem>>, vector<1x1x16x4xf32>
    %cst_23 = arith.constant 0.000000e+00 : f32
    %12 = vector.broadcast %cst_23 : f32 to vector<1x1x16x4xf32>
    %13 = arith.maximumf %11, %12 : vector<1x1x16x4xf32>
    %c0_i32 = arith.constant 0 : i32
    %14 = arith.cmpi sgt, %arg1, %c0_i32 : i32
    %cst_24 = arith.constant 0.000000e+00 : f32
    %15 = vector.broadcast %cst_24 : f32 to vector<1x1x16x4xf32>
    %16 = arith.select %14, %10, %15 : vector<1x1x16x4xf32>
    %17 = arith.truncf %16 : vector<1x1x16x4xf32> to vector<1x1x16x4xbf16>
    %c0_25 = arith.constant 0 : index
    %c0_26 = arith.constant 0 : index
    %c1_27 = arith.constant 1 : index
    %c0_28 = arith.constant 0 : index
    %18 = vector.load %arg10[%c0_25, %c0_26, %c1_27, %c0_28] : memref<1x10x24x4xbf16, #tpu.memory_space<vmem>>, vector<1x1x16x4xbf16>
    tpu.vector_store %arg10[%c0_25, %c0_26, %c1_27, %c0_28], %17 {strides = array<i32>} : memref<1x10x24x4xbf16, #tpu.memory_space<vmem>>, vector<1x1x16x4xbf16>,
    %c1_i32 = arith.constant 1 : i32
    %19 = arith.cmpi slt, %arg1, %c1_i32 : i32
    %cst_29 = arith.constant 0.000000e+00 : f32
    %20 = vector.broadcast %cst_29 : f32 to vector<1x1x16x4xf32>
    %21 = arith.select %19, %13, %20 : vector<1x1x16x4xf32>
    %22 = arith.truncf %21 : vector<1x1x16x4xf32> to vector<1x1x16x4xbf16>
    %c0_30 = arith.constant 0 : index
    %c9 = arith.constant 9 : index
    %c1_31 = arith.constant 1 : index
    %c0_32 = arith.constant 0 : index
    %23 = vector.load %arg10[%c0_30, %c9, %c1_31, %c0_32] : memref<1x10x24x4xbf16, #tpu.memory_space<vmem>>, vector<1x1x16x4xbf16>
    tpu.vector_store %arg10[%c0_30, %c9, %c1_31, %c0_32], %22 {strides = array<i32>} : memref<1x10x24x4xbf16, #tpu.memory_space<vmem>>, vector<1x1x16x4xbf16>,
    %c0_33 = arith.constant 0 : index
    %c0_34 = arith.constant 0 : index
    %c0_35 = arith.constant 0 : index
    %c0_36 = arith.constant 0 : index
    %24 = vector.load %arg10[%c0_33, %c0_34, %c0_35, %c0_36] : memref<1x10x24x4xbf16, #tpu.memory_space<vmem>>, vector<1x10x16x4xbf16>
    %c0_37 = arith.constant 0 : index
    %c0_38 = arith.constant 0 : index
    %c0_39 = arith.constant 0 : index
    %c0_40 = arith.constant 0 : index
    %25 = vector.load %arg11[%c0_37, %c0_38, %c0_39, %c0_40] : memref<1x10x16x12xbf16, #tpu.memory_space<vmem>>, vector<1x10x16x4xbf16>
    tpu.vector_store %arg11[%c0_37, %c0_38, %c0_39, %c0_40], %24 {strides = array<i32>} : memref<1x10x16x12xbf16, #tpu.memory_space<vmem>>, vector<1x10x16x4xbf16>,
    %c0_41 = arith.constant 0 : index
    %c0_42 = arith.constant 0 : index
    %c1_43 = arith.constant 1 : index
    %c0_44 = arith.constant 0 : index
    %26 = vector.load %arg10[%c0_41, %c0_42, %c1_43, %c0_44] : memref<1x10x24x4xbf16, #tpu.memory_space<vmem>>, vector<1x10x16x4xbf16>
    %c0_45 = arith.constant 0 : index
    %c0_46 = arith.constant 0 : index
    %c0_47 = arith.constant 0 : index
    %c4 = arith.constant 4 : index
    %27 = vector.load %arg11[%c0_45, %c0_46, %c0_47, %c4] : memref<1x10x16x12xbf16, #tpu.memory_space<vmem>>, vector<1x10x16x4xbf16>
    tpu.vector_store %arg11[%c0_45, %c0_46, %c0_47, %c4], %26 {strides = array<i32>} : memref<1x10x16x12xbf16, #tpu.memory_space<vmem>>, vector<1x10x16x4xbf16>,
    %c0_48 = arith.constant 0 : index
    %c0_49 = arith.constant 0 : index
    %c2 = arith.constant 2 : index
    %c0_50 = arith.constant 0 : index
    %28 = vector.load %arg10[%c0_48, %c0_49, %c2, %c0_50] : memref<1x10x24x4xbf16, #tpu.memory_space<vmem>>, vector<1x10x16x4xbf16>
    %c0_51 = arith.constant 0 : index
    %c0_52 = arith.constant 0 : index
    %c0_53 = arith.constant 0 : index
    %c8 = arith.constant 8 : index
    %29 = vector.load %arg11[%c0_51, %c0_52, %c0_53, %c8] : memref<1x10x16x12xbf16, #tpu.memory_space<vmem>>, vector<1x10x16x4xbf16>
    tpu.vector_store %arg11[%c0_51, %c0_52, %c0_53, %c8], %28 {strides = array<i32>} : memref<1x10x16x12xbf16, #tpu.memory_space<vmem>>, vector<1x10x16x4xbf16>,
    %c0_54 = arith.constant 0 : index
    %c0_55 = arith.constant 0 : index
    %30 = vector.load %arg6[%c0_54, %c0_55] : memref<1x4xf32, #tpu.memory_space<vmem>>, vector<1x4xf32>
    %31 = vector.shape_cast %30 : vector<1x4xf32> to vector<1x1x1x4xf32>
    %32 = vector.broadcast %31 : vector<1x1x1x4xf32> to vector<1x8x16x4xf32>
    %c0_56 = arith.constant 0 : index
    %c0_57 = arith.constant 0 : index
    %c0_58 = arith.constant 0 : index
    %c0_59 = arith.constant 0 : index
    %33 = vector.load %arg11[%c0_56, %c0_57, %c0_58, %c0_59] : memref<1x10x16x12xbf16, #tpu.memory_space<vmem>>, vector<1x8x16x12xbf16>
    %c0_60 = arith.constant 0 : index
    %c0_61 = arith.constant 0 : index
    %c0_62 = arith.constant 0 : index
    %34 = vector.load %arg5[%c0_60, %c0_61, %c0_62] : memref<3x12x4xbf16, #tpu.memory_space<vmem>>, vector<1x12x4xbf16>
    %35 = vector.shape_cast %34 : vector<1x12x4xbf16> to vector<12x4xbf16>
    "tpu.trace_start"() <{level = 10 : i32, message = "bhwk,kd->bhwd"}> : () -> ()
    %cst_63 = arith.constant dense<0.000000e+00> : vector<1x8x16x4xf32>
    %36 = tpu.matmul %33, %35, %cst_63 {dimension_numbers = #tpu.dot_dimension_numbers<[3], [0], [0, 1, 2], [1], [0, 0, 0, 1, 0, 2, 1, 1], [], []>} : vector<1x8x16x12xbf16>, vector<12x4xbf16>, vector<1x8x16x4xf32> -> vector<1x8x16x4xf32>
    "tpu.trace_stop"() : () -> ()
    %37 = arith.addf %32, %36 : vector<1x8x16x4xf32>
    %c0_64 = arith.constant 0 : index
    %c1_65 = arith.constant 1 : index
    %c0_66 = arith.constant 0 : index
    %c0_67 = arith.constant 0 : index
    %38 = vector.load %arg11[%c0_64, %c1_65, %c0_66, %c0_67] : memref<1x10x16x12xbf16, #tpu.memory_space<vmem>>, vector<1x8x16x12xbf16>
    %c1_68 = arith.constant 1 : index
    %c0_69 = arith.constant 0 : index
    %c0_70 = arith.constant 0 : index
    %39 = vector.load %arg5[%c1_68, %c0_69, %c0_70] : memref<3x12x4xbf16, #tpu.memory_space<vmem>>, vector<1x12x4xbf16>
    %40 = vector.shape_cast %39 : vector<1x12x4xbf16> to vector<12x4xbf16>
    "tpu.trace_start"() <{level = 10 : i32, message = "bhwk,kd->bhwd"}> : () -> ()
    %cst_71 = arith.constant dense<0.000000e+00> : vector<1x8x16x4xf32>
    %41 = tpu.matmul %38, %40, %cst_71 {dimension_numbers = #tpu.dot_dimension_numbers<[3], [0], [0, 1, 2], [1], [0, 0, 0, 1, 0, 2, 1, 1], [], []>} : vector<1x8x16x12xbf16>, vector<12x4xbf16>, vector<1x8x16x4xf32> -> vector<1x8x16x4xf32>
    "tpu.trace_stop"() : () -> ()
    %42 = arith.addf %37, %41 : vector<1x8x16x4xf32>
    %c0_72 = arith.constant 0 : index
    %c2_73 = arith.constant 2 : index
    %c0_74 = arith.constant 0 : index
    %c0_75 = arith.constant 0 : index
    %43 = vector.load %arg11[%c0_72, %c2_73, %c0_74, %c0_75] : memref<1x10x16x12xbf16, #tpu.memory_space<vmem>>, vector<1x8x16x12xbf16>
    %c2_76 = arith.constant 2 : index
    %c0_77 = arith.constant 0 : index
    %c0_78 = arith.constant 0 : index
    %44 = vector.load %arg5[%c2_76, %c0_77, %c0_78] : memref<3x12x4xbf16, #tpu.memory_space<vmem>>, vector<1x12x4xbf16>
    %45 = vector.shape_cast %44 : vector<1x12x4xbf16> to vector<12x4xbf16>
    "tpu.trace_start"() <{level = 10 : i32, message = "bhwk,kd->bhwd"}> : () -> ()
    %cst_79 = arith.constant dense<0.000000e+00> : vector<1x8x16x4xf32>
    %46 = tpu.matmul %43, %45, %cst_79 {dimension_numbers = #tpu.dot_dimension_numbers<[3], [0], [0, 1, 2], [1], [0, 0, 0, 1, 0, 2, 1, 1], [], []>} : vector<1x8x16x12xbf16>, vector<12x4xbf16>, vector<1x8x16x4xf32> -> vector<1x8x16x4xf32>
    "tpu.trace_stop"() : () -> ()
    %47 = arith.addf %42, %46 : vector<1x8x16x4xf32>
    %cst_80 = arith.constant 0.000000e+00 : f32
    %48 = vector.broadcast %cst_80 : f32 to vector<1x8x16x4xf32>
    %49 = arith.maximumf %47, %48 : vector<1x8x16x4xf32>
    %50 = arith.truncf %49 : vector<1x8x16x4xf32> to vector<1x8x16x4xbf16>
    %c0_81 = arith.constant 0 : index
    %c0_82 = arith.constant 0 : index
    %51 = vector.load %arg7[%c0_81, %c0_82] : memref<4x4xbf16, #tpu.memory_space<vmem>>, vector<4x4xbf16>
    "tpu.trace_start"() <{level = 10 : i32, message = "bhwc,cd->bhwd"}> : () -> ()
    %cst_83 = arith.constant dense<0.000000e+00> : vector<1x8x16x4xf32>
    %52 = tpu.matmul %50, %51, %cst_83 {dimension_numbers = #tpu.dot_dimension_numbers<[3], [0], [0, 1, 2], [1], [0, 0, 0, 1, 0, 2, 1, 1], [], []>} : vector<1x8x16x4xbf16>, vector<4x4xbf16>, vector<1x8x16x4xf32> -> vector<1x8x16x4xf32>
    "tpu.trace_stop"() : () -> ()
    %c0_84 = arith.constant 0 : index
    %c0_85 = arith.constant 0 : index
    %53 = vector.load %arg8[%c0_84, %c0_85] : memref<1x4xf32, #tpu.memory_space<vmem>>, vector<1x4xf32>
    %54 = vector.shape_cast %53 : vector<1x4xf32> to vector<1x1x1x4xf32>
    %55 = vector.broadcast %54 : vector<1x1x1x4xf32> to vector<1x8x16x4xf32>
    %56 = arith.addf %52, %55 : vector<1x8x16x4xf32>
    %c0_86 = arith.constant 0 : index
    %c0_87 = arith.constant 0 : index
    %c0_88 = arith.constant 0 : index
    %c0_89 = arith.constant 0 : index
    %57 = vector.load %arg2[%c0_86, %c0_87, %c0_88, %c0_89] : memref<1x8x16x4xf32, #tpu.memory_space<vmem>>, vector<1x8x16x4xf32>
    %58 = arith.addf %56, %57 : vector<1x8x16x4xf32>
    %c0_90 = arith.constant 0 : index
    %c0_91 = arith.constant 0 : index
    %c0_92 = arith.constant 0 : index
    %c0_93 = arith.constant 0 : index
    %59 = vector.load %arg9[%c0_90, %c0_91, %c0_92, %c0_93] : memref<1x8x16x4xf32, #tpu.memory_space<vmem>>, vector<1x8x16x4xf32>
    tpu.vector_store %arg9[%c0_90, %c0_91, %c0_92, %c0_93], %58 {strides = array<i32>} : memref<1x8x16x4xf32, #tpu.memory_space<vmem>>, vector<1x8x16x4xf32>,
    return
  }
  func.func @transform_0(%arg0: i32, %arg1: i32) -> (i32, i32, i32, i32) {
    %c0_i32 = arith.constant 0 : i32
    %c0_i32_0 = arith.constant 0 : i32
    %c0_i32_1 = arith.constant 0 : i32
    return %arg0, %arg1, %c0_i32, %c0_i32_0 : i32, i32, i32, i32
  }
  func.func @transform_1(%arg0: i32, %arg1: i32) -> (i32, i32, i32, i32) {
    %c8_i32 = arith.constant 8 : i32
    %0 = arith.muli %arg1, %c8_i32 : i32
    %c1_i32 = arith.constant 1 : i32
    %1 = arith.subi %0, %c1_i32 : i32
    %c0_i32 = arith.constant 0 : i32
    %2 = arith.maxsi %1, %c0_i32 : i32
    %c0_i32_0 = arith.constant 0 : i32
    %c0_i32_1 = arith.constant 0 : i32
    %c0_i32_2 = arith.constant 0 : i32
    return %arg0, %2, %c0_i32_0, %c0_i32_1 : i32, i32, i32, i32
  }
  func.func @transform_2(%arg0: i32, %arg1: i32) -> (i32, i32, i32, i32) {
    %c1_i32 = arith.constant 1 : i32
    %0 = arith.addi %arg1, %c1_i32 : i32
    %c8_i32 = arith.constant 8 : i32
    %1 = arith.muli %0, %c8_i32 : i32
    %c15_i32 = arith.constant 15 : i32
    %2 = arith.minsi %1, %c15_i32 : i32
    %c0_i32 = arith.constant 0 : i32
    %c0_i32_0 = arith.constant 0 : i32
    %c0_i32_1 = arith.constant 0 : i32
    return %arg0, %2, %c0_i32, %c0_i32_0 : i32, i32, i32, i32
  }
  func.func @transform_3(%arg0: i32, %arg1: i32) -> (i32, i32, i32) {
    %c0_i32 = arith.constant 0 : i32
    %c0_i32_0 = arith.constant 0 : i32
    %c0_i32_1 = arith.constant 0 : i32
    %c0_i32_2 = arith.constant 0 : i32
    return %c0_i32, %c0_i32_0, %c0_i32_1 : i32, i32, i32
  }
  func.func @transform_4(%arg0: i32, %arg1: i32) -> (i32, i32) {
    %c0_i32 = arith.constant 0 : i32
    %c0_i32_0 = arith.constant 0 : i32
    %c0_i32_1 = arith.constant 0 : i32
    return %c0_i32, %c0_i32_0 : i32, i32
  }
  func.func @transform_5(%arg0: i32, %arg1: i32) -> (i32, i32) {
    %c0_i32 = arith.constant 0 : i32
    %c0_i32_0 = arith.constant 0 : i32
    %c0_i32_1 = arith.constant 0 : i32
    return %c0_i32, %c0_i32_0 : i32, i32
  }
  func.func @transform_6(%arg0: i32, %arg1: i32) -> (i32, i32) {
    %c0_i32 = arith.constant 0 : i32
    %c0_i32_0 = arith.constant 0 : i32
    %c0_i32_1 = arith.constant 0 : i32
    return %c0_i32, %c0_i32_0 : i32, i32
  }
  func.func @transform_7(%arg0: i32, %arg1: i32) -> (i32, i32, i32, i32) {
    %c0_i32 = arith.constant 0 : i32
    %c0_i32_0 = arith.constant 0 : i32
    %c0_i32_1 = arith.constant 0 : i32
    return %arg0, %arg1, %c0_i32, %c0_i32_0 : i32, i32, i32, i32
  }
}

</mosaic_0001>

<llo_original>
// kernel: residual_block.1
$region0: #{residual_block.1}
  #allocation0 [shape = 'u32[]', space=smem, size = 0x4, offset = 0x4, fixed_abs, tag = 'smem constant byte address 0x4 - core index']
  #allocation1 [shape = 'u32[72,128]{1,0:T(1,128)}', space=vmem, size = 0x9000, scoped, tag = 'internal scratch']
  #allocation2 [shape = 'bf16[1,10,24,4]{3,2,1,0:T(8,128)(2,1)}', space=vmem, size = 0xf000, scoped, tag = 'scratch operand']
  #allocation3 [shape = 'bf16[1,10,16,12]{3,2,1,0:T(8,128)(2,1)}', space=vmem, size = 0xa000, scoped, tag = 'scratch operand']
  %s0 = inlined_call_operand.vmem [shape: f32[2,16,16,4], index: 0, kind: input, shape index: {}, may-alias: {0,1,2}]
  %s1 = inlined_call_operand.vmem [shape: f32[2,16,16,4], index: 1, kind: input, shape index: {}, may-alias: {0,1,2}]
  %s2 = inlined_call_operand.vmem [shape: f32[2,16,16,4], index: 2, kind: input, shape index: {}, may-alias: {0,1,2}]
  %s3 = inlined_call_operand.vmem [shape: bf16[3,12,4], index: 3, kind: input, shape index: {}]
  %s4 = inlined_call_operand.vmem [shape: f32[1,4], index: 4, kind: input, shape index: {}]
  %s5 = inlined_call_operand.vmem [shape: bf16[4,4], index: 5, kind: input, shape index: {}]
  %s6 = inlined_call_operand.vmem [shape: f32[1,4], index: 6, kind: input, shape index: {}]
  %s7 = inlined_call_operand.vmem [shape: f32[2,16,16,4], index: 7, kind: output, shape index: {}]
  %s8 = sld [smem:[#allocation0]]
  $region61: #{residual_block.1} parent=0
    _
  %s10 = ssub.s32 1, %s8
  %s11 = scalar_select 0, %s10, %s8
  loop: start=0, step=1, limit=6
  $region2: #{residual_block.1} parent=0 // loop_pre_header
    _
  $region3: #{residual_block.1} parent=0 // loop_header
    %s13 = sphi 0, %s17
    %p14 = scmp.ge.s32.totalorder %s13, 6
    %s20 = sphi 0, %s32
    %s21 = sphi 0, %s28
    %s22 = sphi 0, %s20
    %s23 = sphi 0, %s21
    %s24 = sphi 0, %s22
    %s25 = sphi 0, %s23
    %s37 = sphi 0, %s39
    %s40 = sphi 0, %s37
    %s41 = sphi 0, %s40
    %s57 = sphi 0, %s41
    %s73 = sphi 0, %s75
    %s76 = sphi 0, %s73
    %s77 = sphi 0, %s76
    %s93 = sphi 0, %s77
    %s109 = sphi 0, %s111
    %s112 = sphi 0, %s109
    %s113 = sphi 0, %s112
    %s129 = sphi 0, %s113
    %s133 = sphi 0, %s133
    %s135 = sphi 0, %s133
    %s136 = sphi 0, %s135
    %s150 = sphi 0, %s136
    %s154 = sphi 0, %s154
    %s156 = sphi 0, %s154
    %s157 = sphi 0, %s156
    %s171 = sphi 0, %s157
    %s175 = sphi 0, %s175
    %s177 = sphi 0, %s175
    %s178 = sphi 0, %s177
    %s192 = sphi 0, %s178
    %s196 = sphi 0, %s196
    %s198 = sphi 0, %s196
    %s199 = sphi 0, %s198
    %s213 = sphi 0, %s199
    %s221 = sphi 0, %s223
    %s224 = sphi 0, %s221
    %s225 = sphi 0, %s224
    %s241 = sphi 0, %s225
  $region4: #{residual_block.1} parent=0 // loop_header_branch
    %16 = sbr.rel (%p14) target = $region8
  $region5: #{residual_block.1} parent=0 // loop_body
    %s18 = ssub.s32 %s13, 1
    %s19 = ssub.s32 %s13, 2
    %s26 = sadd.s32 1, %s21
    %p27 = scmp.ge.s32.totalorder %s26, 2
    %s28 = scalar_select %p27, 0, %s26
    %s29 = sadd.s32 1, %s20
    %s30 = scalar_select %p27, %s29, %s20
    %p31 = scmp.ge.s32.totalorder %s30, 2
    %s32 = scalar_select %p31, 0, %s30
    %s33 = ssub.s32 %s20, %s32
    %s34 = ssub.s32 %s21, %s28
    %s35 = sor.u32 %s33, %s34
    %p36 = scmp.eq.s32.totalorder %s35, 0
    %s38 = sadd.s32 %s37, 1
    %s39 = scalar_select %p36, %s37, %s38
    %p42 = pneg %p36
    %p43 = scmp.eq.s32.totalorder %s13, 3
    %p44 = por %p42, %p43
    %p45 = scmp.ne.s32.totalorder %s37, %s40
    %p46 = scmp.eq.s32.totalorder %s13, 0
    %p47 = por %p45, %p46
    %p48 = scmp.ne.s32.totalorder %s37, %s40
    %p49 = scmp.eq.s32.totalorder %s18, 3
    %p50 = por %p48, %p49
    %p51 = scmp.ne.s32.totalorder %s40, %s41
    %p52 = scmp.eq.s32.totalorder %s18, 0
    %p53 = por %p51, %p52
    %p54 = scmp.ne.s32.totalorder %s40, %s41
    %p55 = scmp.eq.s32.totalorder %s19, 3
    %p56 = por %p54, %p55
    %p58 = scmp.ne.s32.totalorder %s41, %s57
    %p59 = scmp.eq.s32.totalorder %s19, 0
    %p60 = por %p58, %p59
    %s61 = smul.u32 %s21, 8
    %s62 = ssub.s32 %s61, 1
    %p63 = scmp.gt.s32.totalorder %s62, 0
    %s64 = scalar_select %p63, %s62, 0
    %s65 = smul.u32 %s28, 8
    %s66 = ssub.s32 %s65, 1
    %p67 = scmp.gt.s32.totalorder %s66, 0
    %s68 = scalar_select %p67, %s66, 0
    %s69 = ssub.s32 %s20, %s32
    %s70 = ssub.s32 %s64, %s68
    %s71 = sor.u32 %s69, %s70
    %p72 = scmp.eq.s32.totalorder %s71, 0
    %s74 = sadd.s32 %s73, 1
    %s75 = scalar_select %p72, %s73, %s74
    %p78 = pneg %p72
    %p79 = scmp.eq.s32.totalorder %s13, 3
    %p80 = por %p78, %p79
    %p81 = scmp.ne.s32.totalorder %s73, %s76
    %p82 = scmp.eq.s32.totalorder %s13, 0
    %p83 = por %p81, %p82
    %p84 = scmp.ne.s32.totalorder %s73, %s76
    %p85 = scmp.eq.s32.totalorder %s18, 3
    %p86 = por %p84, %p85
    %p87 = scmp.ne.s32.totalorder %s76, %s77
    %p88 = scmp.eq.s32.totalorder %s18, 0
    %p89 = por %p87, %p88
    %p90 = scmp.ne.s32.totalorder %s76, %s77
    %p91 = scmp.eq.s32.totalorder %s19, 3
    %p92 = por %p90, %p91
    %p94 = scmp.ne.s32.totalorder %s77, %s93
    %p95 = scmp.eq.s32.totalorder %s19, 0
    %p96 = por %p94, %p95
    %s97 = sadd.s32 %s21, 1
    %s98 = smul.u32 %s97, 8
    %p99 = scmp.lt.s32.totalorder %s98, 15
    %s100 = scalar_select %p99, %s98, 15
    %s101 = sadd.s32 %s28, 1
    %s102 = smul.u32 %s101, 8
    %p103 = scmp.lt.s32.totalorder %s102, 15
    %s104 = scalar_select %p103, %s102, 15
    %s105 = ssub.s32 %s20, %s32
    %s106 = ssub.s32 %s100, %s104
    %s107 = sor.u32 %s105, %s106
    %p108 = scmp.eq.s32.totalorder %s107, 0
    %s110 = sadd.s32 %s109, 1
    %s111 = scalar_select %p108, %s109, %s110
    %p114 = pneg %p108
    %p115 = scmp.eq.s32.totalorder %s13, 3
    %p116 = por %p114, %p115
    %p117 = scmp.ne.s32.totalorder %s109, %s112
    %p118 = scmp.eq.s32.totalorder %s13, 0
    %p119 = por %p117, %p118
    %p120 = scmp.ne.s32.totalorder %s109, %s112
    %p121 = scmp.eq.s32.totalorder %s18, 3
    %p122 = por %p120, %p121
    %p123 = scmp.ne.s32.totalorder %s112, %s113
    %p124 = scmp.eq.s32.totalorder %s18, 0
    %p125 = por %p123, %p124
    %p126 = scmp.ne.s32.totalorder %s112, %s113
    %p127 = scmp.eq.s32.totalorder %s19, 3
    %p128 = por %p126, %p127
    %p130 = scmp.ne.s32.totalorder %s113, %s129
    %p131 = scmp.eq.s32.totalorder %s19, 0
    %p132 = por %p130, %p131
    %s134 = sadd.s32 %s133, 1
    %p137 = scmp.eq.s32.totalorder %s13, 3
    %p138 = scmp.ne.s32.totalorder %s133, %s135
    %p139 = scmp.eq.s32.totalorder %s13, 0
    %p140 = por %p138, %p139
    %p141 = scmp.ne.s32.totalorder %s133, %s135
    %p142 = scmp.eq.s32.totalorder %s18, 3
    %p143 = por %p141, %p142
    %p144 = scmp.ne.s32.totalorder %s135, %s136
    %p145 = scmp.eq.s32.totalorder %s18, 0
    %p146 = por %p144, %p145
    %p147 = scmp.ne.s32.totalorder %s135, %s136
    %p148 = scmp.eq.s32.totalorder %s19, 3
    %p149 = por %p147, %p148
    %p151 = scmp.ne.s32.totalorder %s136, %s150
    %p152 = scmp.eq.s32.totalorder %s19, 0
    %p153 = por %p151, %p152
    %s155 = sadd.s32 %s154, 1
    %p158 = scmp.eq.s32.totalorder %s13, 3
    %p159 = scmp.ne.s32.totalorder %s154, %s156
    %p160 = scmp.eq.s32.totalorder %s13, 0
    %p161 = por %p159, %p160
    %p162 = scmp.ne.s32.totalorder %s154, %s156
    %p163 = scmp.eq.s32.totalorder %s18, 3
    %p164 = por %p162, %p163
    %p165 = scmp.ne.s32.totalorder %s156, %s157
    %p166 = scmp.eq.s32.totalorder %s18, 0
    %p167 = por %p165, %p166
    %p168 = scmp.ne.s32.totalorder %s156, %s157
    %p169 = scmp.eq.s32.totalorder %s19, 3
    %p170 = por %p168, %p169
    %p172 = scmp.ne.s32.totalorder %s157, %s171
    %p173 = scmp.eq.s32.totalorder %s19, 0
    %p174 = por %p172, %p173
    %s176 = sadd.s32 %s175, 1
    %p179 = scmp.eq.s32.totalorder %s13, 3
    %p180 = scmp.ne.s32.totalorder %s175, %s177
    %p181 = scmp.eq.s32.totalorder %s13, 0
    %p182 = por %p180, %p181
    %p183 = scmp.ne.s32.totalorder %s175, %s177
    %p184 = scmp.eq.s32.totalorder %s18, 3
    %p185 = por %p183, %p184
    %p186 = scmp.ne.s32.totalorder %s177, %s178
    %p187 = scmp.eq.s32.totalorder %s18, 0
    %p188 = por %p186, %p187
    %p189 = scmp.ne.s32.totalorder %s177, %s178
    %p190 = scmp.eq.s32.totalorder %s19, 3
    %p191 = por %p189, %p190
    %p193 = scmp.ne.s32.totalorder %s178, %s192
    %p194 = scmp.eq.s32.totalorder %s19, 0
    %p195 = por %p193, %p194
    %s197 = sadd.s32 %s196, 1
    %p200 = scmp.eq.s32.totalorder %s13, 3
    %p201 = scmp.ne.s32.totalorder %s196, %s198
    %p202 = scmp.eq.s32.totalorder %s13, 0
    %p203 = por %p201, %p202
    %p204 = scmp.ne.s32.totalorder %s196, %s198
    %p205 = scmp.eq.s32.totalorder %s18, 3
    %p206 = por %p204, %p205
    %p207 = scmp.ne.s32.totalorder %s198, %s199
    %p208 = scmp.eq.s32.totalorder %s18, 0
    %p209 = por %p207, %p208
    %p210 = scmp.ne.s32.totalorder %s198, %s199
    %p211 = scmp.eq.s32.totalorder %s19, 3
    %p212 = por %p210, %p211
    %p214 = scmp.ne.s32.totalorder %s199, %s213
    %p215 = scmp.eq.s32.totalorder %s19, 0
    %p216 = por %p214, %p215
    %s217 = ssub.s32 %s20, %s32
    %s218 = ssub.s32 %s21, %s28
    %s219 = sor.u32 %s217, %s218
    %p220 = scmp.eq.s32.totalorder %s219, 0
    %s222 = sadd.s32 %s221, 1
    %s223 = scalar_select %p220, %s221, %s222
    %p226 = pneg %p220
    %p227 = scmp.eq.s32.totalorder %s13, 3
    %p228 = por %p226, %p227
    %p229 = scmp.ne.s32.totalorder %s221, %s224
    %p230 = scmp.eq.s32.totalorder %s13, 0
    %p231 = por %p229, %p230
    %p232 = scmp.ne.s32.totalorder %s221, %s224
    %p233 = scmp.eq.s32.totalorder %s18, 3
    %p234 = por %p232, %p233
    %p235 = scmp.ne.s32.totalorder %s224, %s225
    %p236 = scmp.eq.s32.totalorder %s18, 0
    %p237 = por %p235, %p236
    %p238 = scmp.ne.s32.totalorder %s224, %s225
    %p239 = scmp.eq.s32.totalorder %s19, 3
    %p240 = por %p238, %p239
    %p242 = scmp.ne.s32.totalorder %s225, %s241
    %p243 = scmp.eq.s32.totalorder %s19, 0
    %p244 = por %p242, %p243
    %p245 = scmp.le.s32.totalorder 1, %s13
    %p246 = scmp.lt.s32.totalorder %s13, 5
    %p247 = pnand %p245, %p246
    %p248 = pneg %p247
    // Predicated region
    $region9: #{residual_block.1} parent=5 // pred_check
      _
    $region10: #{residual_block.1} parent=5 // pred_check_branch
      %250 = sbr.rel (%p247) target = $region12
    $region11: #{residual_block.1} parent=5 // pred_region
      %s251 = ssub.s32 %s13, 1
      // Predicated region
      $region13: #{residual_block.1} parent=11 // pred_check
        %p252 = pneg %p146
      $region14: #{residual_block.1} parent=11 // pred_check_branch
        %254 = sbr.rel (%p252) target = $region16
      $region15: #{residual_block.1} parent=11 // pred_region
        _
      $region16: #{residual_block.1} parent=11 // pred_fallthru
        _
      // Predicated region
      $region17: #{residual_block.1} parent=11 // pred_check
        %p255 = pneg %p167
      $region18: #{residual_block.1} parent=11 // pred_check_branch
        %257 = sbr.rel (%p255) target = $region20
      $region19: #{residual_block.1} parent=11 // pred_region
        _
      $region20: #{residual_block.1} parent=11 // pred_fallthru
        _
      // Predicated region
      $region21: #{residual_block.1} parent=11 // pred_check
        %p258 = pneg %p188
      $region22: #{residual_block.1} parent=11 // pred_check_branch
        %260 = sbr.rel (%p258) target = $region24
      $region23: #{residual_block.1} parent=11 // pred_region
        _
      $region24: #{residual_block.1} parent=11 // pred_fallthru
        _
      // Predicated region
      $region25: #{residual_block.1} parent=11 // pred_check
        %p261 = pneg %p209
      $region26: #{residual_block.1} parent=11 // pred_check_branch
        %263 = sbr.rel (%p261) target = $region28
      $region27: #{residual_block.1} parent=11 // pred_region
        _
      $region28: #{residual_block.1} parent=11 // pred_fallthru
        _
    $region12: #{residual_block.1} parent=5 // pred_fallthru
      _
    %p264 = scmp.lt.s32.totalorder %s13, 4
    // Predicated region
    $region29: #{residual_block.1} parent=5 // pred_check
      %p265 = pneg %p264
    $region30: #{residual_block.1} parent=5 // pred_check_branch
      %267 = sbr.rel (%p265) target = $region32
    $region31: #{residual_block.1} parent=5 // pred_region
      // Predicated region
      $region33: #{residual_block.1} parent=31 // pred_check
        %p268 = pneg %p47
      $region34: #{residual_block.1} parent=31 // pred_check_branch
        %270 = sbr.rel (%p268) target = $region36
      $region35: #{residual_block.1} parent=31 // pred_region
        %s271 = smul.u32 8, %s21
        %p272 = scmp.lt.s32.totalorder %s20, 1
        %s273 = scalar_select %p272, %s20, 1
        %p274 = scmp.lt.s32.totalorder %s271, 15
        %s275 = scalar_select %p274, %s271, 15
        %s276 = smul.addr %s275, 2
        %s277 = smul.addr %s273, 32
        %s278 = sadd.s32 %s276, %s277
        %s279 = smul.addr %s278, 8
        %s280 = scalar_lea.vmem %s0, %s279
        %s281 = smul.u32 8, %s21
      $region36: #{residual_block.1} parent=31 // pred_fallthru
        _
      // Predicated region
      $region37: #{residual_block.1} parent=31 // pred_check
        %p282 = pneg %p83
      $region38: #{residual_block.1} parent=31 // pred_check_branch
        %284 = sbr.rel (%p282) target = $region40
      $region39: #{residual_block.1} parent=31 // pred_region
        %s285 = smul.u32 %s21, 8
        %s286 = ssub.s32 %s285, 1
        %p287 = scmp.gt.s32.totalorder %s286, 0
        %s288 = scalar_select %p287, %s286, 0
        %p289 = scmp.lt.s32.totalorder %s20, 1
        %s290 = scalar_select %p289, %s20, 1
        %p291 = scmp.lt.s32.totalorder %s288, 15
        %s292 = scalar_select %p291, %s288, 15
        %s293 = smul.addr %s292, 2
        %s294 = smul.addr %s290, 32
        %s295 = sadd.s32 %s293, %s294
        %s296 = smul.addr %s295, 8
        %s297 = scalar_lea.vmem %s1, %s296
        %s298 = smul.u32 %s21, 8
        %s299 = ssub.s32 %s298, 1
        %p300 = scmp.gt.s32.totalorder %s299, 0
        %s301 = scalar_select %p300, %s299, 0
      $region40: #{residual_block.1} parent=31 // pred_fallthru
        _
      // Predicated region
      $region41: #{residual_block.1} parent=31 // pred_check
        %p302 = pneg %p119
      $region42: #{residual_block.1} parent=31 // pred_check_branch
        %304 = sbr.rel (%p302) target = $region44
      $region43: #{residual_block.1} parent=31 // pred_region
        %s305 = sadd.s32 %s21, 1
        %s306 = smul.u32 %s305, 8
        %p307 = scmp.lt.s32.totalorder %s306, 15
        %s308 = scalar_select %p307, %s306, 15
        %p309 = scmp.lt.s32.totalorder %s20, 1
        %s310 = scalar_select %p309, %s20, 1
        %p311 = scmp.lt.s32.totalorder %s308, 15
        %s312 = scalar_select %p311, %s308, 15
        %s313 = smul.addr %s312, 2
        %s314 = smul.addr %s310, 32
        %s315 = sadd.s32 %s313, %s314
        %s316 = smul.addr %s315, 8
        %s317 = scalar_lea.vmem %s2, %s316
        %s318 = sadd.s32 %s21, 1
        %s319 = smul.u32 %s318, 8
        %p320 = scmp.lt.s32.totalorder %s319, 15
        %s321 = scalar_select %p320, %s319, 15
      $region44: #{residual_block.1} parent=31 // pred_fallthru
        _
    $region32: #{residual_block.1} parent=5 // pred_fallthru
      _
    %p322 = scmp.le.s32.totalorder 1, %s13
    %p323 = scmp.lt.s32.totalorder %s13, 5
    %p324 = pnand %p322, %p323
    %p325 = pneg %p324
    // Predicated region
    $region45: #{residual_block.1} parent=5 // pred_check
      _
    $region46: #{residual_block.1} parent=5 // pred_check_branch
      %327 = sbr.rel (%p324) target = $region48
    $region47: #{residual_block.1} parent=5 // pred_region
      %s328 = ssub.s32 %s13, 1
      %s329 = smul.u32 8, %s23
      %p330 = scmp.lt.s32.totalorder %s22, 1
      %s331 = scalar_select %p330, %s22, 1
      %p332 = scmp.lt.s32.totalorder %s329, 15
      %s333 = scalar_select %p332, %s329, 15
      %s334 = smul.addr %s333, 2
      %s335 = smul.addr %s331, 32
      %s336 = sadd.s32 %s334, %s335
      %s337 = smul.addr %s336, 8
      %s338 = scalar_lea.vmem %s0, %s337
      %p339 = pneg %p53
      %p340 = pneg %p50
      %s341 = smul.u32 %s23, 8
      %s342 = ssub.s32 %s341, 1
      %p343 = scmp.gt.s32.totalorder %s342, 0
      %s344 = scalar_select %p343, %s342, 0
      %p345 = scmp.lt.s32.totalorder %s22, 1
      %s346 = scalar_select %p345, %s22, 1
      %p347 = scmp.lt.s32.totalorder %s344, 15
      %s348 = scalar_select %p347, %s344, 15
      %s349 = smul.addr %s348, 2
      %s350 = smul.addr %s346, 32
      %s351 = sadd.s32 %s349, %s350
      %s352 = smul.addr %s351, 8
      %s353 = scalar_lea.vmem %s1, %s352
      %p354 = pneg %p89
      %p355 = pneg %p86
      %s356 = sadd.s32 %s23, 1
      %s357 = smul.u32 %s356, 8
      %p358 = scmp.lt.s32.totalorder %s357, 15
      %s359 = scalar_select %p358, %s357, 15
      %p360 = scmp.lt.s32.totalorder %s22, 1
      %s361 = scalar_select %p360, %s22, 1
      %p362 = scmp.lt.s32.totalorder %s359, 15
      %s363 = scalar_select %p362, %s359, 15
      %s364 = smul.addr %s363, 2
      %s365 = smul.addr %s361, 32
      %s366 = sadd.s32 %s364, %s365
      %s367 = smul.addr %s366, 8
      %s368 = scalar_lea.vmem %s2, %s367
      %p369 = pneg %p125
      %p370 = pneg %p122
      %p371 = pneg %p146
      %p372 = pneg %p143
      %p373 = pneg %p167
      %p374 = pneg %p164
      %p375 = pneg %p188
      %p376 = pneg %p185
      %p377 = pneg %p209
      %p378 = pneg %p206
      %p379 = pneg %p237
      %p380 = pneg %p234
      %s381 = smul.u32 8, %s23
      %p382 = scmp.lt.s32.totalorder %s22, 1
      %s383 = scalar_select %p382, %s22, 1
      %p384 = scmp.lt.s32.totalorder %s381, 15
      %s385 = scalar_select %p384, %s381, 15
      %s386 = smul.addr %s385, 2
      %s387 = smul.addr %s383, 32
      %s388 = sadd.s32 %s386, %s387
      %s389 = smul.addr %s388, 8
      %s390 = scalar_lea.vmem %s7, %s389
      %s391 = smul.u32 8, %s23
      %p392 = scmp.lt.s32.totalorder %s22, 1
      %s393 = scalar_select %p392, %s22, 1
      %p394 = scmp.lt.s32.totalorder %s391, 15
      %s395 = scalar_select %p394, %s391, 15
      %s396 = smul.addr %s395, 2
      %s397 = smul.addr %s393, 32
      %s398 = sadd.s32 %s396, %s397
      %s399 = smul.addr %s398, 8
      %s400 = scalar_lea.vmem %s0, %s399
      %s401 = smul.u32 8, %s23
      %s402 = smul.u32 %s23, 8
      %s403 = ssub.s32 %s402, 1
      %p404 = scmp.gt.s32.totalorder %s403, 0
      %s405 = scalar_select %p404, %s403, 0
      %p406 = scmp.lt.s32.totalorder %s22, 1
      %s407 = scalar_select %p406, %s22, 1
      %p408 = scmp.lt.s32.totalorder %s405, 15
      %s409 = scalar_select %p408, %s405, 15
      %s410 = smul.addr %s409, 2
      %s411 = smul.addr %s407, 32
      %s412 = sadd.s32 %s410, %s411
      %s413 = smul.addr %s412, 8
      %s414 = scalar_lea.vmem %s1, %s413
      %s415 = smul.u32 %s23, 8
      %s416 = ssub.s32 %s415, 1
      %p417 = scmp.gt.s32.totalorder %s416, 0
      %s418 = scalar_select %p417, %s416, 0
      %s419 = sadd.s32 %s23, 1
      %s420 = smul.u32 %s419, 8
      %p421 = scmp.lt.s32.totalorder %s420, 15
      %s422 = scalar_select %p421, %s420, 15
      %p423 = scmp.lt.s32.totalorder %s22, 1
      %s424 = scalar_select %p423, %s22, 1
      %p425 = scmp.lt.s32.totalorder %s422, 15
      %s426 = scalar_select %p425, %s422, 15
      %s427 = smul.addr %s426, 2
      %s428 = smul.addr %s424, 32
      %s429 = sadd.s32 %s427, %s428
      %s430 = smul.addr %s429, 8
      %s431 = scalar_lea.vmem %s2, %s430
      %s432 = sadd.s32 %s23, 1
      %s433 = smul.u32 %s432, 8
      %p434 = scmp.lt.s32.totalorder %s433, 15
      %s435 = scalar_select %p434, %s433, 15
      %s436 = smul.u32 8, %s23
      %p437 = scmp.lt.s32.totalorder %s22, 1
      %s438 = scalar_select %p437, %s22, 1
      %p439 = scmp.lt.s32.totalorder %s436, 15
      %s440 = scalar_select %p439, %s436, 15
      %s441 = smul.addr %s440, 2
      %s442 = smul.addr %s438, 32
      %s443 = sadd.s32 %s441, %s442
      %s444 = smul.addr %s443, 8
      %s445 = scalar_lea.vmem %s7, %s444
      %s446 = smul.u32 8, %s23
      %vm448 = vcmask 24576
      %vm449 = vsmask.f32 256
      %vm450 = vmand %vm448, %vm449
      %v451 = vld [vmem:[#allocation2] sm:$0x1]
      %v452 = vsel %vm450, 0, %v451
      %453 = vst [vmem:[#allocation2] sm:$0x1] %v452
      %v454 = vld [vmem:[#allocation2 + $0xc] sm:$0x1]
      %v455 = vsel %vm450, 0, %v454
      %456 = vst [vmem:[#allocation2 + $0xc] sm:$0x1] %v455
      %v457 = vld [vmem:[#allocation2 + $0x18] sm:$0x1]
      %v458 = vsel %vm450, 0, %v457
      %459 = vst [vmem:[#allocation2 + $0x18] sm:$0x1] %v458
      %v460 = vld [vmem:[#allocation2 + $0x24] sm:$0x1]
      %v461 = vsel %vm450, 0, %v460
      %462 = vst [vmem:[#allocation2 + $0x24] sm:$0x1] %v461
      %v463 = vld [vmem:[#allocation2 + $0x30] sm:$0x1]
      %v464 = vsel %vm450, 0, %v463
      %465 = vst [vmem:[#allocation2 + $0x30] sm:$0x1] %v464
      %v466 = vld [vmem:[#allocation2 + $0x3c] sm:$0x1]
      %v467 = vsel %vm450, 0, %v466
      %468 = vst [vmem:[#allocation2 + $0x3c] sm:$0x1] %v467
      %v469 = vld [vmem:[#allocation2 + $0x48] sm:$0x1]
      %v470 = vsel %vm450, 0, %v469
      %471 = vst [vmem:[#allocation2 + $0x48] sm:$0x1] %v470
      %v472 = vld [vmem:[#allocation2 + $0x54] sm:$0x1]
      %v473 = vsel %vm450, 0, %v472
      %474 = vst [vmem:[#allocation2 + $0x54] sm:$0x1] %v473
      %v475 = vld [vmem:[#allocation2 + $0x60] sm:$0x1]
      %v476 = vsel %vm450, 0, %v475
      %477 = vst [vmem:[#allocation2 + $0x60] sm:$0x1] %v476
      %v478 = vld [vmem:[#allocation2 + $0x6c] sm:$0x1]
      %v479 = vsel %vm450, 0, %v478
      %480 = vst [vmem:[#allocation2 + $0x6c] sm:$0x1] %v479
      %vm481 = vsmask.f32 7938
      %vm482 = vmand %vm448, %vm481
      %v483 = vld [vmem:[#allocation2 + $0x8] sm:$0x1]
      %v484 = vsel %vm482, 0, %v483
      %485 = vst [vmem:[#allocation2 + $0x8] sm:$0x1] %v484
      %v486 = vld [vmem:[#allocation2 + $0x14] sm:$0x1]
      %v487 = vsel %vm482, 0, %v486
      %488 = vst [vmem:[#allocation2 + $0x14] sm:$0x1] %v487
      %v489 = vld [vmem:[#allocation2 + $0x20] sm:$0x1]
      %v490 = vsel %vm482, 0, %v489
      %491 = vst [vmem:[#allocation2 + $0x20] sm:$0x1] %v490
      %v492 = vld [vmem:[#allocation2 + $0x2c] sm:$0x1]
      %v493 = vsel %vm482, 0, %v492
      %494 = vst [vmem:[#allocation2 + $0x2c] sm:$0x1] %v493
      %v495 = vld [vmem:[#allocation2 + $0x38] sm:$0x1]
      %v496 = vsel %vm482, 0, %v495
      %497 = vst [vmem:[#allocation2 + $0x38] sm:$0x1] %v496
      %v498 = vld [vmem:[#allocation2 + $0x44] sm:$0x1]
      %v499 = vsel %vm482, 0, %v498
      %500 = vst [vmem:[#allocation2 + $0x44] sm:$0x1] %v499
      %v501 = vld [vmem:[#allocation2 + $0x50] sm:$0x1]
      %v502 = vsel %vm482, 0, %v501
      %503 = vst [vmem:[#allocation2 + $0x50] sm:$0x1] %v502
      %v504 = vld [vmem:[#allocation2 + $0x5c] sm:$0x1]
      %v505 = vsel %vm482, 0, %v504
      %506 = vst [vmem:[#allocation2 + $0x5c] sm:$0x1] %v505
      %v507 = vld [vmem:[#allocation2 + $0x68] sm:$0x1]
      %v508 = vsel %vm482, 0, %v507
      %509 = vst [vmem:[#allocation2 + $0x68] sm:$0x1] %v508
      %v510 = vld [vmem:[#allocation2 + $0x74] sm:$0x1]
      %v511 = vsel %vm482, 0, %v510
      %512 = vst [vmem:[#allocation2 + $0x74] sm:$0x1] %v511
      %v513 = vld [vmem:[%s400] sm:$0xff]
      %v514 = vld [vmem:[%s400 + $0x8] sm:$0xff]
      %v515 = vld [vmem:[%s400 + $0x10] sm:$0xff]
      %v516 = vld [vmem:[%s400 + $0x18] sm:$0xff]
      %v517 = vld [vmem:[%s400 + $0x20] sm:$0xff]
      %v518 = vld [vmem:[%s400 + $0x28] sm:$0xff]
      %v519 = vld [vmem:[%s400 + $0x30] sm:$0xff]
      %v520 = vld [vmem:[%s400 + $0x38] sm:$0xff]
      %v521 = vld [vmem:[%s400 + $0x40] sm:$0xff]
      %v522 = vld [vmem:[%s400 + $0x48] sm:$0xff]
      %v523 = vld [vmem:[%s400 + $0x50] sm:$0xff]
      %v524 = vld [vmem:[%s400 + $0x58] sm:$0xff]
      %v525 = vld [vmem:[%s400 + $0x60] sm:$0xff]
      %v526 = vld [vmem:[%s400 + $0x68] sm:$0xff]
      %v527 = vld [vmem:[%s400 + $0x70] sm:$0xff]
      %v528 = vld [vmem:[%s400 + $0x78] sm:$0xff]
      %v529 = vmax.f32 %v513, 0.0
      %v530 = vmax.f32 %v514, 0.0
      %v531 = vmax.f32 %v515, 0.0
      %v532 = vmax.f32 %v516, 0.0
      %v533 = vmax.f32 %v517, 0.0
      %v534 = vmax.f32 %v518, 0.0
      %v535 = vmax.f32 %v519, 0.0
      %v536 = vmax.f32 %v520, 0.0
      %v537 = vmax.f32 %v521, 0.0
      %v538 = vmax.f32 %v522, 0.0
      %v539 = vmax.f32 %v523, 0.0
      %v540 = vmax.f32 %v524, 0.0
      %v541 = vmax.f32 %v525, 0.0
      %v542 = vmax.f32 %v526, 0.0
      %v543 = vmax.f32 %v527, 0.0
      %v544 = vmax.f32 %v528, 0.0
      %v545 = vpack.c.bf16 %v529, %v529
      %v546 = vpack.c.bf16 %v530, %v530
      %v547 = vpack.c.bf16 %v531, %v531
      %v548 = vpack.c.bf16 %v532, %v532
      %v549 = vpack.c.bf16 %v533, %v533
      %v550 = vpack.c.bf16 %v534, %v534
      %v551 = vpack.c.bf16 %v535, %v535
      %v552 = vpack.c.bf16 %v536, %v536
      %v553 = vpack.c.bf16 %v537, %v537
      %v554 = vpack.c.bf16 %v538, %v538
      %v555 = vpack.c.bf16 %v539, %v539
      %v556 = vpack.c.bf16 %v540, %v540
      %v557 = vpack.c.bf16 %v541, %v541
      %v558 = vpack.c.bf16 %v542, %v542
      %v559 = vpack.c.bf16 %v543, %v543
      %v560 = vpack.c.bf16 %v544, %v544
      %vm561 = vsmask.f32 4368
      %vm562 = vmor %vm449, %vm561
      %v564 = vshrl.u32 %v545, 16
      %v566 = vrot.slane %v564, 7
      %v567 = vshll.u32 %v545, 16
      %v569 = vor.u32 %v566, %v567
      %v570 = vrot.slane %v566, 4
      %v572 = vshrl.u32 %v546, 16
      %v574 = vrot.slane %v572, 7
      %v575 = vshll.u32 %v546, 16
      %v577 = vor.u32 %v574, %v575
      %v578 = vsel %vm562, %v570, %v577
      %v579 = vrot.slane %v574, 4
      %v581 = vshrl.u32 %v547, 16
      %v583 = vrot.slane %v581, 7
      %v584 = vshll.u32 %v547, 16
      %v586 = vor.u32 %v583, %v584
      %v587 = vrot.slane %v583, 4
      %v589 = vshrl.u32 %v548, 16
      %v591 = vrot.slane %v589, 7
      %v592 = vshll.u32 %v548, 16
      %v594 = vor.u32 %v591, %v592
      %v595 = vsel %vm562, %v587, %v594
      %v596 = vrot.slane %v591, 4
      %v598 = vshrl.u32 %v549, 16
      %v600 = vrot.slane %v598, 7
      %v601 = vshll.u32 %v549, 16
      %v603 = vor.u32 %v600, %v601
      %v604 = vrot.slane %v600, 4
      %v606 = vshrl.u32 %v550, 16
      %v608 = vrot.slane %v606, 7
      %v609 = vshll.u32 %v550, 16
      %v611 = vor.u32 %v608, %v609
      %v612 = vsel %vm562, %v604, %v611
      %v613 = vrot.slane %v608, 4
      %v615 = vshrl.u32 %v551, 16
      %v617 = vrot.slane %v615, 7
      %v618 = vshll.u32 %v551, 16
      %v620 = vor.u32 %v617, %v618
      %v621 = vrot.slane %v617, 4
      %v623 = vshrl.u32 %v552, 16
      %v625 = vrot.slane %v623, 7
      %v626 = vshll.u32 %v552, 16
      %v628 = vor.u32 %v625, %v626
      %v629 = vsel %vm562, %v621, %v628
      %v630 = vrot.slane %v625, 4
      %v632 = vshrl.u32 %v553, 16
      %v634 = vrot.slane %v632, 7
      %v635 = vshll.u32 %v553, 16
      %v637 = vor.u32 %v634, %v635
      %v638 = vrot.slane %v634, 4
      %v640 = vshrl.u32 %v554, 16
      %v642 = vrot.slane %v640, 7
      %v643 = vshll.u32 %v554, 16
      %v645 = vor.u32 %v642, %v643
      %v646 = vsel %vm562, %v638, %v645
      %v647 = vrot.slane %v642, 4
      %v649 = vshrl.u32 %v555, 16
      %v651 = vrot.slane %v649, 7
      %v652 = vshll.u32 %v555, 16
      %v654 = vor.u32 %v651, %v652
      %v655 = vrot.slane %v651, 4
      %v657 = vshrl.u32 %v556, 16
      %v659 = vrot.slane %v657, 7
      %v660 = vshll.u32 %v556, 16
      %v662 = vor.u32 %v659, %v660
      %v663 = vsel %vm562, %v655, %v662
      %v664 = vrot.slane %v659, 4
      %v666 = vshrl.u32 %v557, 16
      %v668 = vrot.slane %v666, 7
      %v669 = vshll.u32 %v557, 16
      %v671 = vor.u32 %v668, %v669
      %v672 = vrot.slane %v668, 4
      %v674 = vshrl.u32 %v558, 16
      %v676 = vrot.slane %v674, 7
      %v677 = vshll.u32 %v558, 16
      %v679 = vor.u32 %v676, %v677
      %v680 = vsel %vm562, %v672, %v679
      %v681 = vrot.slane %v676, 4
      %v683 = vshrl.u32 %v559, 16
      %v685 = vrot.slane %v683, 7
      %v686 = vshll.u32 %v559, 16
      %v688 = vor.u32 %v685, %v686
      %v689 = vrot.slane %v685, 4
      %v691 = vshrl.u32 %v560, 16
      %v693 = vrot.slane %v691, 7
      %v694 = vshll.u32 %v560, 16
      %v696 = vor.u32 %v693, %v694
      %v697 = vsel %vm562, %v689, %v696
      %v698 = vrot.slane %v693, 4
      %s723 = scalar_lea.vmem [#allocation2], 12
      %vm724 = vcmask 27648
      %vm725 = vmand %vm724, %vm481
      %v726 = vld [vmem:[%s723] sm:$0xf]
      %v727 = vsel %vm725, %v569, %v726
      %728 = vst [vmem:[%s723] sm:$0xf] %v727
      %vm729 = vcmask 27648
      %730 = vst.msk [vmem:[%s723 + $0x4] sm:$0xf] %vm729, %v578
      %v731 = vld [vmem:[%s723 + $0x8] sm:$0x1]
      %v732 = vsel %vm450, %v579, %v731
      %733 = vst [vmem:[%s723 + $0x8] sm:$0x1] %v732
      %v734 = vld [vmem:[%s723 + $0xc] sm:$0xf]
      %v735 = vsel %vm725, %v586, %v734
      %736 = vst [vmem:[%s723 + $0xc] sm:$0xf] %v735
      %737 = vst.msk [vmem:[%s723 + $0x10] sm:$0xf] %vm729, %v595
      %v738 = vld [vmem:[%s723 + $0x14] sm:$0x1]
      %v739 = vsel %vm450, %v596, %v738
      %740 = vst [vmem:[%s723 + $0x14] sm:$0x1] %v739
      %v741 = vld [vmem:[%s723 + $0x18] sm:$0xf]
      %v742 = vsel %vm725, %v603, %v741
      %743 = vst [vmem:[%s723 + $0x18] sm:$0xf] %v742
      %744 = vst.msk [vmem:[%s723 + $0x1c] sm:$0xf] %vm729, %v612
      %v745 = vld [vmem:[%s723 + $0x20] sm:$0x1]
      %v746 = vsel %vm450, %v613, %v745
      %747 = vst [vmem:[%s723 + $0x20] sm:$0x1] %v746
      %v748 = vld [vmem:[%s723 + $0x24] sm:$0xf]
      %v749 = vsel %vm725, %v620, %v748
      %750 = vst [vmem:[%s723 + $0x24] sm:$0xf] %v749
      %751 = vst.msk [vmem:[%s723 + $0x28] sm:$0xf] %vm729, %v629
      %v752 = vld [vmem:[%s723 + $0x2c] sm:$0x1]
      %v753 = vsel %vm450, %v630, %v752
      %754 = vst [vmem:[%s723 + $0x2c] sm:$0x1] %v753
      %v755 = vld [vmem:[%s723 + $0x30] sm:$0xf]
      %v756 = vsel %vm725, %v637, %v755
      %757 = vst [vmem:[%s723 + $0x30] sm:$0xf] %v756
      %758 = vst.msk [vmem:[%s723 + $0x34] sm:$0xf] %vm729, %v646
      %v759 = vld [vmem:[%s723 + $0x38] sm:$0x1]
      %v760 = vsel %vm450, %v647, %v759
      %761 = vst [vmem:[%s723 + $0x38] sm:$0x1] %v760
      %v762 = vld [vmem:[%s723 + $0x3c] sm:$0xf]
      %v763 = vsel %vm725, %v654, %v762
      %764 = vst [vmem:[%s723 + $0x3c] sm:$0xf] %v763
      %765 = vst.msk [vmem:[%s723 + $0x40] sm:$0xf] %vm729, %v663
      %v766 = vld [vmem:[%s723 + $0x44] sm:$0x1]
      %v767 = vsel %vm450, %v664, %v766
      %768 = vst [vmem:[%s723 + $0x44] sm:$0x1] %v767
      %v769 = vld [vmem:[%s723 + $0x48] sm:$0xf]
      %v770 = vsel %vm725, %v671, %v769
      %771 = vst [vmem:[%s723 + $0x48] sm:$0xf] %v770
      %772 = vst.msk [vmem:[%s723 + $0x4c] sm:$0xf] %vm729, %v680
      %v773 = vld [vmem:[%s723 + $0x50] sm:$0x1]
      %v774 = vsel %vm450, %v681, %v773
      %775 = vst [vmem:[%s723 + $0x50] sm:$0x1] %v774
      %v776 = vld [vmem:[%s723 + $0x54] sm:$0xf]
      %v777 = vsel %vm725, %v688, %v776
      %778 = vst [vmem:[%s723 + $0x54] sm:$0xf] %v777
      %779 = vst.msk [vmem:[%s723 + $0x58] sm:$0xf] %vm729, %v697
      %v780 = vld [vmem:[%s723 + $0x5c] sm:$0x1]
      %v781 = vsel %vm450, %v698, %v780
      %782 = vst [vmem:[%s723 + $0x5c] sm:$0x1] %v781
      %v783 = vld [vmem:[%s414] sm:$0xff]
      %v784 = vld [vmem:[%s414 + $0x8] sm:$0xff]
      %v785 = vmax.f32 %v783, 0.0
      %v786 = vmax.f32 %v784, 0.0
      %v787 = vld [vmem:[%s431] sm:$0xff]
      %v788 = vld [vmem:[%s431 + $0x8] sm:$0xff]
      %v789 = vmax.f32 %v787, 0.0
      %v790 = vmax.f32 %v788, 0.0
      %p791 = scmp.gt.s32.totalorder %s23, 0
      %s792 = scalar_select %p791, 1, 0
      %v793 = vstv %s792
      %vm794 = vcmp.eq.s32.totalorder %v793, 1
      %v795 = vsel %vm794, %v785, 0.0
      %v796 = vsel %vm794, %v786, 0.0
      %v797 = vpack.c.bf16 %v795, %v795
      %v798 = vpack.c.bf16 %v796, %v796
      %v800 = vshrl.u32 %v797, 16
      %v802 = vrot.slane %v800, 7
      %v803 = vshll.u32 %v797, 16
      %v805 = vor.u32 %v802, %v803
      %v806 = vrot.slane %v802, 4
      %v808 = vshrl.u32 %v798, 16
      %v810 = vrot.slane %v808, 7
      %v811 = vshll.u32 %v798, 16
      %v813 = vor.u32 %v810, %v811
      %v814 = vsel %vm562, %v806, %v813
      %v815 = vrot.slane %v810, 4
      %v819 = vld [vmem:[#allocation2] sm:$0xf]
      %v820 = vsel %vm725, %v805, %v819
      %821 = vst [vmem:[#allocation2] sm:$0xf] %v820
      %822 = vst.msk [vmem:[#allocation2 + $0x4] sm:$0xf] %vm729, %v814
      %v823 = vld [vmem:[#allocation2 + $0x8] sm:$0x1]
      %v824 = vsel %vm450, %v815, %v823
      %825 = vst [vmem:[#allocation2 + $0x8] sm:$0x1] %v824
      %p826 = scmp.lt.s32.totalorder %s23, 1
      %s827 = scalar_select %p826, 1, 0
      %v828 = vstv %s827
      %vm829 = vcmp.eq.s32.totalorder %v828, 1
      %v830 = vsel %vm829, %v789, 0.0
      %v831 = vsel %vm829, %v790, 0.0
      %v832 = vpack.c.bf16 %v830, %v830
      %v833 = vpack.c.bf16 %v831, %v831
      %v835 = vshrl.u32 %v832, 16
      %v837 = vrot.slane %v835, 7
      %v838 = vshll.u32 %v832, 16
      %v840 = vor.u32 %v837, %v838
      %v841 = vrot.slane %v837, 4
      %v843 = vshrl.u32 %v833, 16
      %v845 = vrot.slane %v843, 7
      %v846 = vshll.u32 %v833, 16
      %v848 = vor.u32 %v845, %v846
      %v849 = vsel %vm562, %v841, %v848
      %v850 = vrot.slane %v845, 4
      %s854 = scalar_lea.vmem [#allocation2], 108
      %v855 = vld [vmem:[%s854] sm:$0xf]
      %v856 = vsel %vm725, %v840, %v855
      %857 = vst [vmem:[%s854] sm:$0xf] %v856
      %858 = vst.msk [vmem:[%s854 + $0x4] sm:$0xf] %vm729, %v849
      %v859 = vld [vmem:[%s854 + $0x8] sm:$0x1]
      %v860 = vsel %vm450, %v850, %v859
      %861 = vst [vmem:[%s854 + $0x8] sm:$0x1] %v860
      %v862 = vld [vmem:[#allocation2] sm:$0xf]
      %v863 = vld [vmem:[#allocation2 + $0x4] sm:$0xf]
      %v864 = vld [vmem:[#allocation2 + $0xc] sm:$0xf]
      %v865 = vld [vmem:[#allocation2 + $0x10] sm:$0xf]
      %v866 = vld [vmem:[#allocation2 + $0x18] sm:$0xf]
      %v867 = vld [vmem:[#allocation2 + $0x1c] sm:$0xf]
      %v868 = vld [vmem:[#allocation2 + $0x24] sm:$0xf]
      %v869 = vld [vmem:[#allocation2 + $0x28] sm:$0xf]
      %v870 = vld [vmem:[#allocation2 + $0x30] sm:$0xf]
      %v871 = vld [vmem:[#allocation2 + $0x34] sm:$0xf]
      %v872 = vld [vmem:[#allocation2 + $0x3c] sm:$0xf]
      %v873 = vld [vmem:[#allocation2 + $0x40] sm:$0xf]
      %v874 = vld [vmem:[#allocation2 + $0x48] sm:$0xf]
      %v875 = vld [vmem:[#allocation2 + $0x4c] sm:$0xf]
      %v876 = vld [vmem:[#allocation2 + $0x54] sm:$0xf]
      %v877 = vld [vmem:[#allocation2 + $0x58] sm:$0xf]
      %v878 = vld [vmem:[#allocation2 + $0x60] sm:$0xf]
      %v879 = vld [vmem:[#allocation2 + $0x64] sm:$0xf]
      %v880 = vld [vmem:[#allocation2 + $0x6c] sm:$0xf]
      %v881 = vld [vmem:[#allocation2 + $0x70] sm:$0xf]
      %882 = vst.msk [vmem:[#allocation3] sm:$0xf] %vm729, %v862
      %883 = vst.msk [vmem:[#allocation3 + $0x4] sm:$0xf] %vm729, %v863
      %884 = vst.msk [vmem:[#allocation3 + $0x8] sm:$0xf] %vm729, %v864
      %885 = vst.msk [vmem:[#allocation3 + $0xc] sm:$0xf] %vm729, %v865
      %886 = vst.msk [vmem:[#allocation3 + $0x10] sm:$0xf] %vm729, %v866
      %887 = vst.msk [vmem:[#allocation3 + $0x14] sm:$0xf] %vm729, %v867
      %888 = vst.msk [vmem:[#allocation3 + $0x18] sm:$0xf] %vm729, %v868
      %889 = vst.msk [vmem:[#allocation3 + $0x1c] sm:$0xf] %vm729, %v869
      %890 = vst.msk [vmem:[#allocation3 + $0x20] sm:$0xf] %vm729, %v870
      %891 = vst.msk [vmem:[#allocation3 + $0x24] sm:$0xf] %vm729, %v871
      %892 = vst.msk [vmem:[#allocation3 + $0x28] sm:$0xf] %vm729, %v872
      %893 = vst.msk [vmem:[#allocation3 + $0x2c] sm:$0xf] %vm729, %v873
      %894 = vst.msk [vmem:[#allocation3 + $0x30] sm:$0xf] %vm729, %v874
      %895 = vst.msk [vmem:[#allocation3 + $0x34] sm:$0xf] %vm729, %v875
      %896 = vst.msk [vmem:[#allocation3 + $0x38] sm:$0xf] %vm729, %v876
      %897 = vst.msk [vmem:[#allocation3 + $0x3c] sm:$0xf] %vm729, %v877
      %898 = vst.msk [vmem:[#allocation3 + $0x40] sm:$0xf] %vm729, %v878
      %899 = vst.msk [vmem:[#allocation3 + $0x44] sm:$0xf] %vm729, %v879
      %900 = vst.msk [vmem:[#allocation3 + $0x48] sm:$0xf] %vm729, %v880
      %901 = vst.msk [vmem:[#allocation3 + $0x4c] sm:$0xf] %vm729, %v881
      %v902 = vld [vmem:[#allocation2] sm:$0xf]
      %v903 = vld [vmem:[#allocation2 + $0x4] sm:$0xf]
      %v904 = vld [vmem:[#allocation2 + $0x8] sm:$0x1]
      %v905 = vld [vmem:[#allocation2 + $0xc] sm:$0xf]
      %v906 = vld [vmem:[#allocation2 + $0x10] sm:$0xf]
      %v907 = vld [vmem:[#allocation2 + $0x14] sm:$0x1]
      %v908 = vld [vmem:[#allocation2 + $0x18] sm:$0xf]
      %v909 = vld [vmem:[#allocation2 + $0x1c] sm:$0xf]
      %v910 = vld [vmem:[#allocation2 + $0x20] sm:$0x1]
      %v911 = vld [vmem:[#allocation2 + $0x24] sm:$0xf]
      %v912 = vld [vmem:[#allocation2 + $0x28] sm:$0xf]
      %v913 = vld [vmem:[#allocation2 + $0x2c] sm:$0x1]
      %v914 = vld [vmem:[#allocation2 + $0x30] sm:$0xf]
      %v915 = vld [vmem:[#allocation2 + $0x34] sm:$0xf]
      %v916 = vld [vmem:[#allocation2 + $0x38] sm:$0x1]
      %v917 = vld [vmem:[#allocation2 + $0x3c] sm:$0xf]
      %v918 = vld [vmem:[#allocation2 + $0x40] sm:$0xf]
      %v919 = vld [vmem:[#allocation2 + $0x44] sm:$0x1]
      %v920 = vld [vmem:[#allocation2 + $0x48] sm:$0xf]
      %v921 = vld [vmem:[#allocation2 + $0x4c] sm:$0xf]
      %v922 = vld [vmem:[#allocation2 + $0x50] sm:$0x1]
      %v923 = vld [vmem:[#allocation2 + $0x54] sm:$0xf]
      %v924 = vld [vmem:[#allocation2 + $0x58] sm:$0xf]
      %v925 = vld [vmem:[#allocation2 + $0x5c] sm:$0x1]
      %v926 = vld [vmem:[#allocation2 + $0x60] sm:$0xf]
      %v927 = vld [vmem:[#allocation2 + $0x64] sm:$0xf]
      %v928 = vld [vmem:[#allocation2 + $0x68] sm:$0x1]
      %v929 = vld [vmem:[#allocation2 + $0x6c] sm:$0xf]
      %v930 = vld [vmem:[#allocation2 + $0x70] sm:$0xf]
      %v931 = vld [vmem:[#allocation2 + $0x74] sm:$0x1]
      %vm932 = vsmask.f32 3328
      %vm933 = vsmask.f32 7440
      %vm934 = vmor %vm932, %vm933
      %v936 = vshrl.u32 %v902, 16
      %v938 = vrot.slane %v936, 4
      %v939 = vshll.u32 %v902, 16
      %v941 = vrot.slane %v939, 5
      %v942 = vor.u32 %v938, %v941
      %v943 = vrot.slane %v942, 4
      %v945 = vshll.u32 %v903, 16
      %v947 = vrot.slane %v945, 5
      %v948 = vsel %vm934, %v943, %v947
      %v949 = vshrl.u32 %v903, 16
      %v951 = vrot.slane %v949, 4
      %v952 = vor.u32 %v951, %v947
      %v953 = vrot.slane %v952, 4
      %v955 = vshll.u32 %v904, 16
      %v957 = vrot.slane %v955, 5
      %v958 = vsel %vm934, %v953, %v957
      %v960 = vshrl.u32 %v905, 16
      %v962 = vrot.slane %v960, 4
      %v963 = vshll.u32 %v905, 16
      %v965 = vrot.slane %v963, 5
      %v966 = vor.u32 %v962, %v965
      %v967 = vrot.slane %v966, 4
      %v969 = vshll.u32 %v906, 16
      %v971 = vrot.slane %v969, 5
      %v972 = vsel %vm934, %v967, %v971
      %v973 = vshrl.u32 %v906, 16
      %v975 = vrot.slane %v973, 4
      %v976 = vor.u32 %v975, %v971
      %v977 = vrot.slane %v976, 4
      %v979 = vshll.u32 %v907, 16
      %v981 = vrot.slane %v979, 5
      %v982 = vsel %vm934, %v977, %v981
      %v984 = vshrl.u32 %v908, 16
      %v986 = vrot.slane %v984, 4
      %v987 = vshll.u32 %v908, 16
      %v989 = vrot.slane %v987, 5
      %v990 = vor.u32 %v986, %v989
      %v991 = vrot.slane %v990, 4
      %v993 = vshll.u32 %v909, 16
      %v995 = vrot.slane %v993, 5
      %v996 = vsel %vm934, %v991, %v995
      %v997 = vshrl.u32 %v909, 16
      %v999 = vrot.slane %v997, 4
      %v1000 = vor.u32 %v999, %v995
      %v1001 = vrot.slane %v1000, 4
      %v1003 = vshll.u32 %v910, 16
      %v1005 = vrot.slane %v1003, 5
      %v1006 = vsel %vm934, %v1001, %v1005
      %v1008 = vshrl.u32 %v911, 16
      %v1010 = vrot.slane %v1008, 4
      %v1011 = vshll.u32 %v911, 16
      %v1013 = vrot.slane %v1011, 5
      %v1014 = vor.u32 %v1010, %v1013
      %v1015 = vrot.slane %v1014, 4
      %v1017 = vshll.u32 %v912, 16
      %v1019 = vrot.slane %v1017, 5
      %v1020 = vsel %vm934, %v1015, %v1019
      %v1021 = vshrl.u32 %v912, 16
      %v1023 = vrot.slane %v1021, 4
      %v1024 = vor.u32 %v1023, %v1019
      %v1025 = vrot.slane %v1024, 4
      %v1027 = vshll.u32 %v913, 16
      %v1029 = vrot.slane %v1027, 5
      %v1030 = vsel %vm934, %v1025, %v1029
      %v1032 = vshrl.u32 %v914, 16
      %v1034 = vrot.slane %v1032, 4
      %v1035 = vshll.u32 %v914, 16
      %v1037 = vrot.slane %v1035, 5
      %v1038 = vor.u32 %v1034, %v1037
      %v1039 = vrot.slane %v1038, 4
      %v1041 = vshll.u32 %v915, 16
      %v1043 = vrot.slane %v1041, 5
      %v1044 = vsel %vm934, %v1039, %v1043
      %v1045 = vshrl.u32 %v915, 16
      %v1047 = vrot.slane %v1045, 4
      %v1048 = vor.u32 %v1047, %v1043
      %v1049 = vrot.slane %v1048, 4
      %v1051 = vshll.u32 %v916, 16
      %v1053 = vrot.slane %v1051, 5
      %v1054 = vsel %vm934, %v1049, %v1053
      %v1056 = vshrl.u32 %v917, 16
      %v1058 = vrot.slane %v1056, 4
      %v1059 = vshll.u32 %v917, 16
      %v1061 = vrot.slane %v1059, 5
      %v1062 = vor.u32 %v1058, %v1061
      %v1063 = vrot.slane %v1062, 4
      %v1065 = vshll.u32 %v918, 16
      %v1067 = vrot.slane %v1065, 5
      %v1068 = vsel %vm934, %v1063, %v1067
      %v1069 = vshrl.u32 %v918, 16
      %v1071 = vrot.slane %v1069, 4
      %v1072 = vor.u32 %v1071, %v1067
      %v1073 = vrot.slane %v1072, 4
      %v1075 = vshll.u32 %v919, 16
      %v1077 = vrot.slane %v1075, 5
      %v1078 = vsel %vm934, %v1073, %v1077
      %v1080 = vshrl.u32 %v920, 16
      %v1082 = vrot.slane %v1080, 4
      %v1083 = vshll.u32 %v920, 16
      %v1085 = vrot.slane %v1083, 5
      %v1086 = vor.u32 %v1082, %v1085
      %v1087 = vrot.slane %v1086, 4
      %v1089 = vshll.u32 %v921, 16
      %v1091 = vrot.slane %v1089, 5
      %v1092 = vsel %vm934, %v1087, %v1091
      %v1093 = vshrl.u32 %v921, 16
      %v1095 = vrot.slane %v1093, 4
      %v1096 = vor.u32 %v1095, %v1091
      %v1097 = vrot.slane %v1096, 4
      %v1099 = vshll.u32 %v922, 16
      %v1101 = vrot.slane %v1099, 5
      %v1102 = vsel %vm934, %v1097, %v1101
      %v1104 = vshrl.u32 %v923, 16
      %v1106 = vrot.slane %v1104, 4
      %v1107 = vshll.u32 %v923, 16
      %v1109 = vrot.slane %v1107, 5
      %v1110 = vor.u32 %v1106, %v1109
      %v1111 = vrot.slane %v1110, 4
      %v1113 = vshll.u32 %v924, 16
      %v1115 = vrot.slane %v1113, 5
      %v1116 = vsel %vm934, %v1111, %v1115
      %v1117 = vshrl.u32 %v924, 16
      %v1119 = vrot.slane %v1117, 4
      %v1120 = vor.u32 %v1119, %v1115
      %v1121 = vrot.slane %v1120, 4
      %v1123 = vshll.u32 %v925, 16
      %v1125 = vrot.slane %v1123, 5
      %v1126 = vsel %vm934, %v1121, %v1125
      %v1128 = vshrl.u32 %v926, 16
      %v1130 = vrot.slane %v1128, 4
      %v1131 = vshll.u32 %v926, 16
      %v1133 = vrot.slane %v1131, 5
      %v1134 = vor.u32 %v1130, %v1133
      %v1135 = vrot.slane %v1134, 4
      %v1137 = vshll.u32 %v927, 16
      %v1139 = vrot.slane %v1137, 5
      %v1140 = vsel %vm934, %v1135, %v1139
      %v1141 = vshrl.u32 %v927, 16
      %v1143 = vrot.slane %v1141, 4
      %v1144 = vor.u32 %v1143, %v1139
      %v1145 = vrot.slane %v1144, 4
      %v1147 = vshll.u32 %v928, 16
      %v1149 = vrot.slane %v1147, 5
      %v1150 = vsel %vm934, %v1145, %v1149
      %v1152 = vshrl.u32 %v929, 16
      %v1154 = vrot.slane %v1152, 4
      %v1155 = vshll.u32 %v929, 16
      %v1157 = vrot.slane %v1155, 5
      %v1158 = vor.u32 %v1154, %v1157
      %v1159 = vrot.slane %v1158, 4
      %v1161 = vshll.u32 %v930, 16
      %v1163 = vrot.slane %v1161, 5
      %v1164 = vsel %vm934, %v1159, %v1163
      %v1165 = vshrl.u32 %v930, 16
      %v1167 = vrot.slane %v1165, 4
      %v1168 = vor.u32 %v1167, %v1163
      %v1169 = vrot.slane %v1168, 4
      %v1171 = vshll.u32 %v931, 16
      %v1173 = vrot.slane %v1171, 5
      %v1174 = vsel %vm934, %v1169, %v1173
      %1175 = vrot.lane.b32.xlu0 %v948, 4
      %v1176 = vpop.permute.xlu0 %1175
      %1177 = vrot.lane.b32.xlu0 %v958, 4
      %v1178 = vpop.permute.xlu0 %1177
      %1179 = vrot.lane.b32.xlu0 %v972, 4
      %v1180 = vpop.permute.xlu0 %1179
      %1181 = vrot.lane.b32.xlu0 %v982, 4
      %v1182 = vpop.permute.xlu0 %1181
      %1183 = vrot.lane.b32.xlu0 %v996, 4
      %v1184 = vpop.permute.xlu0 %1183
      %1185 = vrot.lane.b32.xlu0 %v1006, 4
      %v1186 = vpop.permute.xlu0 %1185
      %1187 = vrot.lane.b32.xlu0 %v1020, 4
      %v1188 = vpop.permute.xlu0 %1187
      %1189 = vrot.lane.b32.xlu0 %v1030, 4
      %v1190 = vpop.permute.xlu0 %1189
      %1191 = vrot.lane.b32.xlu0 %v1044, 4
      %v1192 = vpop.permute.xlu0 %1191
      %1193 = vrot.lane.b32.xlu0 %v1054, 4
      %v1194 = vpop.permute.xlu0 %1193
      %1195 = vrot.lane.b32.xlu0 %v1068, 4
      %v1196 = vpop.permute.xlu0 %1195
      %1197 = vrot.lane.b32.xlu0 %v1078, 4
      %v1198 = vpop.permute.xlu0 %1197
      %1199 = vrot.lane.b32.xlu0 %v1092, 4
      %v1200 = vpop.permute.xlu0 %1199
      %1201 = vrot.lane.b32.xlu0 %v1102, 4
      %v1202 = vpop.permute.xlu0 %1201
      %1203 = vrot.lane.b32.xlu0 %v1116, 4
      %v1204 = vpop.permute.xlu0 %1203
      %1205 = vrot.lane.b32.xlu0 %v1126, 4
      %v1206 = vpop.permute.xlu0 %1205
      %1207 = vrot.lane.b32.xlu0 %v1140, 4
      %v1208 = vpop.permute.xlu0 %1207
      %1209 = vrot.lane.b32.xlu0 %v1150, 4
      %v1210 = vpop.permute.xlu0 %1209
      %1211 = vrot.lane.b32.xlu0 %v1164, 4
      %v1212 = vpop.permute.xlu0 %1211
      %1213 = vrot.lane.b32.xlu0 %v1174, 4
      %v1214 = vpop.permute.xlu0 %1213
      %vm1235 = vcmask 60448
      %1236 = vst.msk [vmem:[#allocation3] sm:$0xf] %vm1235, %v1176
      %1237 = vst.msk [vmem:[#allocation3 + $0x4] sm:$0xf] %vm1235, %v1178
      %1238 = vst.msk [vmem:[#allocation3 + $0x8] sm:$0xf] %vm1235, %v1180
      %1239 = vst.msk [vmem:[#allocation3 + $0xc] sm:$0xf] %vm1235, %v1182
      %1240 = vst.msk [vmem:[#allocation3 + $0x10] sm:$0xf] %vm1235, %v1184
      %1241 = vst.msk [vmem:[#allocation3 + $0x14] sm:$0xf] %vm1235, %v1186
      %1242 = vst.msk [vmem:[#allocation3 + $0x18] sm:$0xf] %vm1235, %v1188
      %1243 = vst.msk [vmem:[#allocation3 + $0x1c] sm:$0xf] %vm1235, %v1190
      %1244 = vst.msk [vmem:[#allocation3 + $0x20] sm:$0xf] %vm1235, %v1192
      %1245 = vst.msk [vmem:[#allocation3 + $0x24] sm:$0xf] %vm1235, %v1194
      %1246 = vst.msk [vmem:[#allocation3 + $0x28] sm:$0xf] %vm1235, %v1196
      %1247 = vst.msk [vmem:[#allocation3 + $0x2c] sm:$0xf] %vm1235, %v1198
      %1248 = vst.msk [vmem:[#allocation3 + $0x30] sm:$0xf] %vm1235, %v1200
      %1249 = vst.msk [vmem:[#allocation3 + $0x34] sm:$0xf] %vm1235, %v1202
      %1250 = vst.msk [vmem:[#allocation3 + $0x38] sm:$0xf] %vm1235, %v1204
      %1251 = vst.msk [vmem:[#allocation3 + $0x3c] sm:$0xf] %vm1235, %v1206
      %1252 = vst.msk [vmem:[#allocation3 + $0x40] sm:$0xf] %vm1235, %v1208
      %1253 = vst.msk [vmem:[#allocation3 + $0x44] sm:$0xf] %vm1235, %v1210
      %1254 = vst.msk [vmem:[#allocation3 + $0x48] sm:$0xf] %vm1235, %v1212
      %1255 = vst.msk [vmem:[#allocation3 + $0x4c] sm:$0xf] %vm1235, %v1214
      %v1256 = vld [vmem:[#allocation2] sm:$0xe]
      %v1257 = vld [vmem:[#allocation2 + $0x4] sm:$0xf]
      %v1258 = vld [vmem:[#allocation2 + $0x8] sm:$0x1]
      %v1259 = vld [vmem:[#allocation2 + $0xc] sm:$0xe]
      %v1260 = vld [vmem:[#allocation2 + $0x10] sm:$0xf]
      %v1261 = vld [vmem:[#allocation2 + $0x14] sm:$0x1]
      %v1262 = vld [vmem:[#allocation2 + $0x18] sm:$0xe]
      %v1263 = vld [vmem:[#allocation2 + $0x1c] sm:$0xf]
      %v1264 = vld [vmem:[#allocation2 + $0x20] sm:$0x1]
      %v1265 = vld [vmem:[#allocation2 + $0x24] sm:$0xe]
      %v1266 = vld [vmem:[#allocation2 + $0x28] sm:$0xf]
      %v1267 = vld [vmem:[#allocation2 + $0x2c] sm:$0x1]
      %v1268 = vld [vmem:[#allocation2 + $0x30] sm:$0xe]
      %v1269 = vld [vmem:[#allocation2 + $0x34] sm:$0xf]
      %v1270 = vld [vmem:[#allocation2 + $0x38] sm:$0x1]
      %v1271 = vld [vmem:[#allocation2 + $0x3c] sm:$0xe]
      %v1272 = vld [vmem:[#allocation2 + $0x40] sm:$0xf]
      %v1273 = vld [vmem:[#allocation2 + $0x44] sm:$0x1]
      %v1274 = vld [vmem:[#allocation2 + $0x48] sm:$0xe]
      %v1275 = vld [vmem:[#allocation2 + $0x4c] sm:$0xf]
      %v1276 = vld [vmem:[#allocation2 + $0x50] sm:$0x1]
      %v1277 = vld [vmem:[#allocation2 + $0x54] sm:$0xe]
      %v1278 = vld [vmem:[#allocation2 + $0x58] sm:$0xf]
      %v1279 = vld [vmem:[#allocation2 + $0x5c] sm:$0x1]
      %v1280 = vld [vmem:[#allocation2 + $0x60] sm:$0xe]
      %v1281 = vld [vmem:[#allocation2 + $0x64] sm:$0xf]
      %v1282 = vld [vmem:[#allocation2 + $0x68] sm:$0x1]
      %v1283 = vld [vmem:[#allocation2 + $0x6c] sm:$0xe]
      %v1284 = vld [vmem:[#allocation2 + $0x70] sm:$0xf]
      %v1285 = vld [vmem:[#allocation2 + $0x74] sm:$0x1]
      %vm1316 = vcmask 1042432
      %vm1317 = vcmask 1046532
      %vm1318 = vmor %vm1316, %vm1317
      %v1319 = vrot.slane %v1256, 5
      %v1320 = vrot.slane %v1319, 4
      %v1321 = vrot.slane %v1257, 5
      %v1322 = vsel %vm1318, %v1320, %v1321
      %v1323 = vrot.slane %v1321, 4
      %v1324 = vrot.slane %v1258, 5
      %v1325 = vsel %vm1318, %v1323, %v1324
      %v1326 = vrot.slane %v1259, 5
      %v1327 = vrot.slane %v1326, 4
      %v1328 = vrot.slane %v1260, 5
      %v1329 = vsel %vm1318, %v1327, %v1328
      %v1330 = vrot.slane %v1328, 4
      %v1331 = vrot.slane %v1261, 5
      %v1332 = vsel %vm1318, %v1330, %v1331
      %v1333 = vrot.slane %v1262, 5
      %v1334 = vrot.slane %v1333, 4
      %v1335 = vrot.slane %v1263, 5
      %v1336 = vsel %vm1318, %v1334, %v1335
      %v1337 = vrot.slane %v1335, 4
      %v1338 = vrot.slane %v1264, 5
      %v1339 = vsel %vm1318, %v1337, %v1338
      %v1340 = vrot.slane %v1265, 5
      %v1341 = vrot.slane %v1340, 4
      %v1342 = vrot.slane %v1266, 5
      %v1343 = vsel %vm1318, %v1341, %v1342
      %v1344 = vrot.slane %v1342, 4
      %v1345 = vrot.slane %v1267, 5
      %v1346 = vsel %vm1318, %v1344, %v1345
      %v1347 = vrot.slane %v1268, 5
      %v1348 = vrot.slane %v1347, 4
      %v1349 = vrot.slane %v1269, 5
      %v1350 = vsel %vm1318, %v1348, %v1349
      %v1351 = vrot.slane %v1349, 4
      %v1352 = vrot.slane %v1270, 5
      %v1353 = vsel %vm1318, %v1351, %v1352
      %v1354 = vrot.slane %v1271, 5
      %v1355 = vrot.slane %v1354, 4
      %v1356 = vrot.slane %v1272, 5
      %v1357 = vsel %vm1318, %v1355, %v1356
      %v1358 = vrot.slane %v1356, 4
      %v1359 = vrot.slane %v1273, 5
      %v1360 = vsel %vm1318, %v1358, %v1359
      %v1361 = vrot.slane %v1274, 5
      %v1362 = vrot.slane %v1361, 4
      %v1363 = vrot.slane %v1275, 5
      %v1364 = vsel %vm1318, %v1362, %v1363
      %v1365 = vrot.slane %v1363, 4
      %v1366 = vrot.slane %v1276, 5
      %v1367 = vsel %vm1318, %v1365, %v1366
      %v1368 = vrot.slane %v1277, 5
      %v1369 = vrot.slane %v1368, 4
      %v1370 = vrot.slane %v1278, 5
      %v1371 = vsel %vm1318, %v1369, %v1370
      %v1372 = vrot.slane %v1370, 4
      %v1373 = vrot.slane %v1279, 5
      %v1374 = vsel %vm1318, %v1372, %v1373
      %v1375 = vrot.slane %v1280, 5
      %v1376 = vrot.slane %v1375, 4
      %v1377 = vrot.slane %v1281, 5
      %v1378 = vsel %vm1318, %v1376, %v1377
      %v1379 = vrot.slane %v1377, 4
      %v1380 = vrot.slane %v1282, 5
      %v1381 = vsel %vm1318, %v1379, %v1380
      %v1382 = vrot.slane %v1283, 5
      %v1383 = vrot.slane %v1382, 4
      %v1384 = vrot.slane %v1284, 5
      %v1385 = vsel %vm1318, %v1383, %v1384
      %v1386 = vrot.slane %v1384, 4
      %v1387 = vrot.slane %v1285, 5
      %v1388 = vsel %vm1318, %v1386, %v1387
      %1389 = vrot.lane.b32.xlu0 %v1322, 8
      %v1390 = vpop.permute.xlu0 %1389
      %1391 = vrot.lane.b32.xlu0 %v1325, 8
      %v1392 = vpop.permute.xlu0 %1391
      %1393 = vrot.lane.b32.xlu0 %v1329, 8
      %v1394 = vpop.permute.xlu0 %1393
      %1395 = vrot.lane.b32.xlu0 %v1332, 8
      %v1396 = vpop.permute.xlu0 %1395
      %1397 = vrot.lane.b32.xlu0 %v1336, 8
      %v1398 = vpop.permute.xlu0 %1397
      %1399 = vrot.lane.b32.xlu0 %v1339, 8
      %v1400 = vpop.permute.xlu0 %1399
      %1401 = vrot.lane.b32.xlu0 %v1343, 8
      %v1402 = vpop.permute.xlu0 %1401
      %1403 = vrot.lane.b32.xlu0 %v1346, 8
      %v1404 = vpop.permute.xlu0 %1403
      %1405 = vrot.lane.b32.xlu0 %v1350, 8
      %v1406 = vpop.permute.xlu0 %1405
      %1407 = vrot.lane.b32.xlu0 %v1353, 8
      %v1408 = vpop.permute.xlu0 %1407
      %1409 = vrot.lane.b32.xlu0 %v1357, 8
      %v1410 = vpop.permute.xlu0 %1409
      %1411 = vrot.lane.b32.xlu0 %v1360, 8
      %v1412 = vpop.permute.xlu0 %1411
      %1413 = vrot.lane.b32.xlu0 %v1364, 8
      %v1414 = vpop.permute.xlu0 %1413
      %1415 = vrot.lane.b32.xlu0 %v1367, 8
      %v1416 = vpop.permute.xlu0 %1415
      %1417 = vrot.lane.b32.xlu0 %v1371, 8
      %v1418 = vpop.permute.xlu0 %1417
      %1419 = vrot.lane.b32.xlu0 %v1374, 8
      %v1420 = vpop.permute.xlu0 %1419
      %1421 = vrot.lane.b32.xlu0 %v1378, 8
      %v1422 = vpop.permute.xlu0 %1421
      %1423 = vrot.lane.b32.xlu0 %v1381, 8
      %v1424 = vpop.permute.xlu0 %1423
      %1425 = vrot.lane.b32.xlu0 %v1385, 8
      %v1426 = vpop.permute.xlu0 %1425
      %1427 = vrot.lane.b32.xlu0 %v1388, 8
      %v1428 = vpop.permute.xlu0 %1427
      %vm1449 = vcmask 93248
      %1450 = vst.msk [vmem:[#allocation3] sm:$0xf] %vm1449, %v1390
      %1451 = vst.msk [vmem:[#allocation3 + $0x4] sm:$0xf] %vm1449, %v1392
      %1452 = vst.msk [vmem:[#allocation3 + $0x8] sm:$0xf] %vm1449, %v1394
      %1453 = vst.msk [vmem:[#allocation3 + $0xc] sm:$0xf] %vm1449, %v1396
      %1454 = vst.msk [vmem:[#allocation3 + $0x10] sm:$0xf] %vm1449, %v1398
      %1455 = vst.msk [vmem:[#allocation3 + $0x14] sm:$0xf] %vm1449, %v1400
      %1456 = vst.msk [vmem:[#allocation3 + $0x18] sm:$0xf] %vm1449, %v1402
      %1457 = vst.msk [vmem:[#allocation3 + $0x1c] sm:$0xf] %vm1449, %v1404
      %1458 = vst.msk [vmem:[#allocation3 + $0x20] sm:$0xf] %vm1449, %v1406
      %1459 = vst.msk [vmem:[#allocation3 + $0x24] sm:$0xf] %vm1449, %v1408
      %1460 = vst.msk [vmem:[#allocation3 + $0x28] sm:$0xf] %vm1449, %v1410
      %1461 = vst.msk [vmem:[#allocation3 + $0x2c] sm:$0xf] %vm1449, %v1412
      %1462 = vst.msk [vmem:[#allocation3 + $0x30] sm:$0xf] %vm1449, %v1414
      %1463 = vst.msk [vmem:[#allocation3 + $0x34] sm:$0xf] %vm1449, %v1416
      %1464 = vst.msk [vmem:[#allocation3 + $0x38] sm:$0xf] %vm1449, %v1418
      %1465 = vst.msk [vmem:[#allocation3 + $0x3c] sm:$0xf] %vm1449, %v1420
      %1466 = vst.msk [vmem:[#allocation3 + $0x40] sm:$0xf] %vm1449, %v1422
      %1467 = vst.msk [vmem:[#allocation3 + $0x44] sm:$0xf] %vm1449, %v1424
      %1468 = vst.msk [vmem:[#allocation3 + $0x48] sm:$0xf] %vm1449, %v1426
      %1469 = vst.msk [vmem:[#allocation3 + $0x4c] sm:$0xf] %vm1449, %v1428
      %v1470 = vld [vmem:[%s4] sm:$0x1]
      %v1472 = vperm.slane %v1470, 0
      %v1474 = vld [vmem:[#allocation3] sm:$0xf]
      %v1475 = vld [vmem:[#allocation3 + $0x4] sm:$0xf]
      %v1476 = vld [vmem:[#allocation3 + $0x8] sm:$0xf]
      %v1477 = vld [vmem:[#allocation3 + $0xc] sm:$0xf]
      %v1478 = vld [vmem:[#allocation3 + $0x10] sm:$0xf]
      %v1479 = vld [vmem:[#allocation3 + $0x14] sm:$0xf]
      %v1480 = vld [vmem:[#allocation3 + $0x18] sm:$0xf]
      %v1481 = vld [vmem:[#allocation3 + $0x1c] sm:$0xf]
      %v1482 = vld [vmem:[#allocation3 + $0x20] sm:$0xf]
      %v1483 = vld [vmem:[#allocation3 + $0x24] sm:$0xf]
      %v1484 = vld [vmem:[#allocation3 + $0x28] sm:$0xf]
      %v1485 = vld [vmem:[#allocation3 + $0x2c] sm:$0xf]
      %v1486 = vld [vmem:[#allocation3 + $0x30] sm:$0xf]
      %v1487 = vld [vmem:[#allocation3 + $0x34] sm:$0xf]
      %v1488 = vld [vmem:[#allocation3 + $0x38] sm:$0xf]
      %v1489 = vld [vmem:[#allocation3 + $0x3c] sm:$0xf]
      %v1490 = vld [vmem:[%s3] sm:$0xf]
      %v1491 = vld [vmem:[%s3 + $0x4] sm:$0x3]
      %v1508 = vunpack.c.l.b16 %v1474
      %v1509 = vunpack.c.l.b16 %v1475
      %v1510 = vunpack.c.l.b16 %v1476
      %v1511 = vunpack.c.l.b16 %v1477
      %v1512 = vunpack.c.l.b16 %v1478
      %v1513 = vunpack.c.l.b16 %v1479
      %v1514 = vunpack.c.l.b16 %v1480
      %v1515 = vunpack.c.l.b16 %v1481
      %v1516 = vunpack.c.l.b16 %v1482
      %v1517 = vunpack.c.l.b16 %v1483
      %v1518 = vunpack.c.l.b16 %v1484
      %v1519 = vunpack.c.l.b16 %v1485
      %v1520 = vunpack.c.l.b16 %v1486
      %v1521 = vunpack.c.l.b16 %v1487
      %v1522 = vunpack.c.l.b16 %v1488
      %v1523 = vunpack.c.l.b16 %v1489
      %v1524 = vpack.c.b16 %v1509, %v1508
      %v1525 = vpack.c.b16 %v1511, %v1510
      %v1526 = vpack.c.b16 %v1513, %v1512
      %v1527 = vpack.c.b16 %v1515, %v1514
      %v1528 = vpack.c.b16 %v1517, %v1516
      %v1529 = vpack.c.b16 %v1519, %v1518
      %v1530 = vpack.c.b16 %v1521, %v1520
      %v1531 = vpack.c.b16 %v1523, %v1522
      %v1534 = vunpack.c.l.b16 %v1490
      %v1535 = vunpack.c.l.b16 %v1491
      %v1536 = vpack.c.b16 %v1535, %v1534
      %vm1537 = vcmask 97280
      %v1539 = vsel %vm1537, %v1524, 0
      %v1542 = vsel %vm1537, %v1525, 0
      %v1545 = vsel %vm1537, %v1526, 0
      %v1548 = vsel %vm1537, %v1527, 0
      %v1551 = vsel %vm1537, %v1528, 0
      %v1554 = vsel %vm1537, %v1529, 0
      %v1557 = vsel %vm1537, %v1530, 0
      %v1560 = vsel %vm1537, %v1531, 0
      %vm1562 = vcmask 1045504
      %v1564 = vsel %vm1562, %v1536, 0
      %1566 = vmatpush.bf16.msra.mxu0 0
      %1567 = vmatpush.bf16.msra.mxu0 0
      %1568 = vmatpush.bf16.msra.mxu0 0
      %1569 = vmatpush.bf16.msra.mxu0 0
      %1570 = vmatpush.bf16.msra.mxu0 0
      %1571 = vmatpush.bf16.msra.mxu0 0
      %1572 = vmatpush.bf16.msra.mxu0 0
      %1573 = vmatpush.bf16.msra.mxu0 %v1564
      %1574 = vmatmul.bf16.gmra.mxu0 %v1539
      %v1575 = vpop.f32.mrf.mxu0
      %v1576 = vadd.f32 0.0, %v1575
      %v1577 = vpop.f32.mrf.mxu0
      %v1578 = vadd.f32 0.0, %v1577
      %1579 = vmatmul.bf16.gmra.mxu0 %v1542
      %v1580 = vpop.f32.mrf.mxu0
      %v1581 = vadd.f32 0.0, %v1580
      %v1582 = vpop.f32.mrf.mxu0
      %v1583 = vadd.f32 0.0, %v1582
      %1584 = vmatmul.bf16.gmra.mxu0 %v1545
      %v1585 = vpop.f32.mrf.mxu0
      %v1586 = vadd.f32 0.0, %v1585
      %v1587 = vpop.f32.mrf.mxu0
      %v1588 = vadd.f32 0.0, %v1587
      %1589 = vmatmul.bf16.gmra.mxu0 %v1548
      %v1590 = vpop.f32.mrf.mxu0
      %v1591 = vadd.f32 0.0, %v1590
      %v1592 = vpop.f32.mrf.mxu0
      %v1593 = vadd.f32 0.0, %v1592
      %1594 = vmatmul.bf16.gmra.mxu0 %v1551
      %v1595 = vpop.f32.mrf.mxu0
      %v1596 = vadd.f32 0.0, %v1595
      %v1597 = vpop.f32.mrf.mxu0
      %v1598 = vadd.f32 0.0, %v1597
      %1599 = vmatmul.bf16.gmra.mxu0 %v1554
      %v1600 = vpop.f32.mrf.mxu0
      %v1601 = vadd.f32 0.0, %v1600
      %v1602 = vpop.f32.mrf.mxu0
      %v1603 = vadd.f32 0.0, %v1602
      %1604 = vmatmul.bf16.gmra.mxu0 %v1557
      %v1605 = vpop.f32.mrf.mxu0
      %v1606 = vadd.f32 0.0, %v1605
      %v1607 = vpop.f32.mrf.mxu0
      %v1608 = vadd.f32 0.0, %v1607
      %1609 = vmatmul.bf16.gmra.mxu0 %v1560
      %v1610 = vpop.f32.mrf.mxu0
      %v1611 = vadd.f32 0.0, %v1610
      %v1612 = vpop.f32.mrf.mxu0
      %v1613 = vadd.f32 0.0, %v1612
      %1614 = vdwg.mxu0
      %v1615 = vadd.f32 %v1472, %v1576
      %v1616 = vadd.f32 %v1472, %v1578
      %v1617 = vadd.f32 %v1472, %v1581
      %v1618 = vadd.f32 %v1472, %v1583
      %v1619 = vadd.f32 %v1472, %v1586
      %v1620 = vadd.f32 %v1472, %v1588
      %v1621 = vadd.f32 %v1472, %v1591
      %v1622 = vadd.f32 %v1472, %v1593
      %v1623 = vadd.f32 %v1472, %v1596
      %v1624 = vadd.f32 %v1472, %v1598
      %v1625 = vadd.f32 %v1472, %v1601
      %v1626 = vadd.f32 %v1472, %v1603
      %v1627 = vadd.f32 %v1472, %v1606
      %v1628 = vadd.f32 %v1472, %v1608
      %v1629 = vadd.f32 %v1472, %v1611
      %v1630 = vadd.f32 %v1472, %v1613
      %s1631 = scalar_lea.vmem [#allocation3], 8
      %v1632 = vld [vmem:[%s1631] sm:$0xf]
      %v1633 = vld [vmem:[%s1631 + $0x4] sm:$0xf]
      %v1634 = vld [vmem:[%s1631 + $0x8] sm:$0xf]
      %v1635 = vld [vmem:[%s1631 + $0xc] sm:$0xf]
      %v1636 = vld [vmem:[%s1631 + $0x10] sm:$0xf]
      %v1637 = vld [vmem:[%s1631 + $0x14] sm:$0xf]
      %v1638 = vld [vmem:[%s1631 + $0x18] sm:$0xf]
      %v1639 = vld [vmem:[%s1631 + $0x1c] sm:$0xf]
      %v1640 = vld [vmem:[%s1631 + $0x20] sm:$0xf]
      %v1641 = vld [vmem:[%s1631 + $0x24] sm:$0xf]
      %v1642 = vld [vmem:[%s1631 + $0x28] sm:$0xf]
      %v1643 = vld [vmem:[%s1631 + $0x2c] sm:$0xf]
      %v1644 = vld [vmem:[%s1631 + $0x30] sm:$0xf]
      %v1645 = vld [vmem:[%s1631 + $0x34] sm:$0xf]
      %v1646 = vld [vmem:[%s1631 + $0x38] sm:$0xf]
      %v1647 = vld [vmem:[%s1631 + $0x3c] sm:$0xf]
      %s1648 = scalar_lea.vmem %s3, 8
      %v1649 = vld [vmem:[%s1648] sm:$0xf]
      %v1650 = vld [vmem:[%s1648 + $0x4] sm:$0x3]
      %v1667 = vunpack.c.l.b16 %v1632
      %v1668 = vunpack.c.l.b16 %v1633
      %v1669 = vunpack.c.l.b16 %v1634
      %v1670 = vunpack.c.l.b16 %v1635
      %v1671 = vunpack.c.l.b16 %v1636
      %v1672 = vunpack.c.l.b16 %v1637
      %v1673 = vunpack.c.l.b16 %v1638
      %v1674 = vunpack.c.l.b16 %v1639
      %v1675 = vunpack.c.l.b16 %v1640
      %v1676 = vunpack.c.l.b16 %v1641
      %v1677 = vunpack.c.l.b16 %v1642
      %v1678 = vunpack.c.l.b16 %v1643
      %v1679 = vunpack.c.l.b16 %v1644
      %v1680 = vunpack.c.l.b16 %v1645
      %v1681 = vunpack.c.l.b16 %v1646
      %v1682 = vunpack.c.l.b16 %v1647
      %v1683 = vpack.c.b16 %v1668, %v1667
      %v1684 = vpack.c.b16 %v1670, %v1669
      %v1685 = vpack.c.b16 %v1672, %v1671
      %v1686 = vpack.c.b16 %v1674, %v1673
      %v1687 = vpack.c.b16 %v1676, %v1675
      %v1688 = vpack.c.b16 %v1678, %v1677
      %v1689 = vpack.c.b16 %v1680, %v1679
      %v1690 = vpack.c.b16 %v1682, %v1681
      %v1693 = vunpack.c.l.b16 %v1649
      %v1694 = vunpack.c.l.b16 %v1650
      %v1695 = vpack.c.b16 %v1694, %v1693
      %v1697 = vsel %vm1537, %v1683, 0
      %v1700 = vsel %vm1537, %v1684, 0
      %v1703 = vsel %vm1537, %v1685, 0
      %v1706 = vsel %vm1537, %v1686, 0
      %v1709 = vsel %vm1537, %v1687, 0
      %v1712 = vsel %vm1537, %v1688, 0
      %v1715 = vsel %vm1537, %v1689, 0
      %v1718 = vsel %vm1537, %v1690, 0
      %v1721 = vsel %vm1562, %v1695, 0
      %1723 = vmatpush.bf16.msra.mxu0 0
      %1724 = vmatpush.bf16.msra.mxu0 0
      %1725 = vmatpush.bf16.msra.mxu0 0
      %1726 = vmatpush.bf16.msra.mxu0 0
      %1727 = vmatpush.bf16.msra.mxu0 0
      %1728 = vmatpush.bf16.msra.mxu0 0
      %1729 = vmatpush.bf16.msra.mxu0 0
      %1730 = vmatpush.bf16.msra.mxu0 %v1721
      %1731 = vmatmul.bf16.gmra.mxu0 %v1697
      %v1732 = vpop.f32.mrf.mxu0
      %v1733 = vadd.f32 0.0, %v1732
      %v1734 = vpop.f32.mrf.mxu0
      %v1735 = vadd.f32 0.0, %v1734
      %1736 = vmatmul.bf16.gmra.mxu0 %v1700
      %v1737 = vpop.f32.mrf.mxu0
      %v1738 = vadd.f32 0.0, %v1737
      %v1739 = vpop.f32.mrf.mxu0
      %v1740 = vadd.f32 0.0, %v1739
      %1741 = vmatmul.bf16.gmra.mxu0 %v1703
      %v1742 = vpop.f32.mrf.mxu0
      %v1743 = vadd.f32 0.0, %v1742
      %v1744 = vpop.f32.mrf.mxu0
      %v1745 = vadd.f32 0.0, %v1744
      %1746 = vmatmul.bf16.gmra.mxu0 %v1706
      %v1747 = vpop.f32.mrf.mxu0
      %v1748 = vadd.f32 0.0, %v1747
      %v1749 = vpop.f32.mrf.mxu0
      %v1750 = vadd.f32 0.0, %v1749
      %1751 = vmatmul.bf16.gmra.mxu0 %v1709
      %v1752 = vpop.f32.mrf.mxu0
      %v1753 = vadd.f32 0.0, %v1752
      %v1754 = vpop.f32.mrf.mxu0
      %v1755 = vadd.f32 0.0, %v1754
      %1756 = vmatmul.bf16.gmra.mxu0 %v1712
      %v1757 = vpop.f32.mrf.mxu0
      %v1758 = vadd.f32 0.0, %v1757
      %v1759 = vpop.f32.mrf.mxu0
      %v1760 = vadd.f32 0.0, %v1759
      %1761 = vmatmul.bf16.gmra.mxu0 %v1715
      %v1762 = vpop.f32.mrf.mxu0
      %v1763 = vadd.f32 0.0, %v1762
      %v1764 = vpop.f32.mrf.mxu0
      %v1765 = vadd.f32 0.0, %v1764
      %1766 = vmatmul.bf16.gmra.mxu0 %v1718
      %v1767 = vpop.f32.mrf.mxu0
      %v1768 = vadd.f32 0.0, %v1767
      %v1769 = vpop.f32.mrf.mxu0
      %v1770 = vadd.f32 0.0, %v1769
      %1771 = vdwg.mxu0
      %v1772 = vadd.f32 %v1615, %v1733
      %v1773 = vadd.f32 %v1616, %v1735
      %v1774 = vadd.f32 %v1617, %v1738
      %v1775 = vadd.f32 %v1618, %v1740
      %v1776 = vadd.f32 %v1619, %v1743
      %v1777 = vadd.f32 %v1620, %v1745
      %v1778 = vadd.f32 %v1621, %v1748
      %v1779 = vadd.f32 %v1622, %v1750
      %v1780 = vadd.f32 %v1623, %v1753
      %v1781 = vadd.f32 %v1624, %v1755
      %v1782 = vadd.f32 %v1625, %v1758
      %v1783 = vadd.f32 %v1626, %v1760
      %v1784 = vadd.f32 %v1627, %v1763
      %v1785 = vadd.f32 %v1628, %v1765
      %v1786 = vadd.f32 %v1629, %v1768
      %v1787 = vadd.f32 %v1630, %v1770
      %s1788 = scalar_lea.vmem [#allocation3], 16
      %v1789 = vld [vmem:[%s1788] sm:$0xf]
      %v1790 = vld [vmem:[%s1788 + $0x4] sm:$0xf]
      %v1791 = vld [vmem:[%s1788 + $0x8] sm:$0xf]
      %v1792 = vld [vmem:[%s1788 + $0xc] sm:$0xf]
      %v1793 = vld [vmem:[%s1788 + $0x10] sm:$0xf]
      %v1794 = vld [vmem:[%s1788 + $0x14] sm:$0xf]
      %v1795 = vld [vmem:[%s1788 + $0x18] sm:$0xf]
      %v1796 = vld [vmem:[%s1788 + $0x1c] sm:$0xf]
      %v1797 = vld [vmem:[%s1788 + $0x20] sm:$0xf]
      %v1798 = vld [vmem:[%s1788 + $0x24] sm:$0xf]
      %v1799 = vld [vmem:[%s1788 + $0x28] sm:$0xf]
      %v1800 = vld [vmem:[%s1788 + $0x2c] sm:$0xf]
      %v1801 = vld [vmem:[%s1788 + $0x30] sm:$0xf]
      %v1802 = vld [vmem:[%s1788 + $0x34] sm:$0xf]
      %v1803 = vld [vmem:[%s1788 + $0x38] sm:$0xf]
      %v1804 = vld [vmem:[%s1788 + $0x3c] sm:$0xf]
      %s1805 = scalar_lea.vmem %s3, 16
      %v1806 = vld [vmem:[%s1805] sm:$0xf]
      %v1807 = vld [vmem:[%s1805 + $0x4] sm:$0x3]
      %v1824 = vunpack.c.l.b16 %v1789
      %v1825 = vunpack.c.l.b16 %v1790
      %v1826 = vunpack.c.l.b16 %v1791
      %v1827 = vunpack.c.l.b16 %v1792
      %v1828 = vunpack.c.l.b16 %v1793
      %v1829 = vunpack.c.l.b16 %v1794
      %v1830 = vunpack.c.l.b16 %v1795
      %v1831 = vunpack.c.l.b16 %v1796
      %v1832 = vunpack.c.l.b16 %v1797
      %v1833 = vunpack.c.l.b16 %v1798
      %v1834 = vunpack.c.l.b16 %v1799
      %v1835 = vunpack.c.l.b16 %v1800
      %v1836 = vunpack.c.l.b16 %v1801
      %v1837 = vunpack.c.l.b16 %v1802
      %v1838 = vunpack.c.l.b16 %v1803
      %v1839 = vunpack.c.l.b16 %v1804
      %v1840 = vpack.c.b16 %v1825, %v1824
      %v1841 = vpack.c.b16 %v1827, %v1826
      %v1842 = vpack.c.b16 %v1829, %v1828
      %v1843 = vpack.c.b16 %v1831, %v1830
      %v1844 = vpack.c.b16 %v1833, %v1832
      %v1845 = vpack.c.b16 %v1835, %v1834
      %v1846 = vpack.c.b16 %v1837, %v1836
      %v1847 = vpack.c.b16 %v1839, %v1838
      %v1850 = vunpack.c.l.b16 %v1806
      %v1851 = vunpack.c.l.b16 %v1807
      %v1852 = vpack.c.b16 %v1851, %v1850
      %v1854 = vsel %vm1537, %v1840, 0
      %v1857 = vsel %vm1537, %v1841, 0
      %v1860 = vsel %vm1537, %v1842, 0
      %v1863 = vsel %vm1537, %v1843, 0
      %v1866 = vsel %vm1537, %v1844, 0
      %v1869 = vsel %vm1537, %v1845, 0
      %v1872 = vsel %vm1537, %v1846, 0
      %v1875 = vsel %vm1537, %v1847, 0
      %v1878 = vsel %vm1562, %v1852, 0
      %1880 = vmatpush.bf16.msra.mxu0 0
      %1881 = vmatpush.bf16.msra.mxu0 0
      %1882 = vmatpush.bf16.msra.mxu0 0
      %1883 = vmatpush.bf16.msra.mxu0 0
      %1884 = vmatpush.bf16.msra.mxu0 0
      %1885 = vmatpush.bf16.msra.mxu0 0
      %1886 = vmatpush.bf16.msra.mxu0 0
      %1887 = vmatpush.bf16.msra.mxu0 %v1878
      %1888 = vmatmul.bf16.gmra.mxu0 %v1854
      %v1889 = vpop.f32.mrf.mxu0
      %v1890 = vadd.f32 0.0, %v1889
      %v1891 = vpop.f32.mrf.mxu0
      %v1892 = vadd.f32 0.0, %v1891
      %1893 = vmatmul.bf16.gmra.mxu0 %v1857
      %v1894 = vpop.f32.mrf.mxu0
      %v1895 = vadd.f32 0.0, %v1894
      %v1896 = vpop.f32.mrf.mxu0
      %v1897 = vadd.f32 0.0, %v1896
      %1898 = vmatmul.bf16.gmra.mxu0 %v1860
      %v1899 = vpop.f32.mrf.mxu0
      %v1900 = vadd.f32 0.0, %v1899
      %v1901 = vpop.f32.mrf.mxu0
      %v1902 = vadd.f32 0.0, %v1901
      %1903 = vmatmul.bf16.gmra.mxu0 %v1863
      %v1904 = vpop.f32.mrf.mxu0
      %v1905 = vadd.f32 0.0, %v1904
      %v1906 = vpop.f32.mrf.mxu0
      %v1907 = vadd.f32 0.0, %v1906
      %1908 = vmatmul.bf16.gmra.mxu0 %v1866
      %v1909 = vpop.f32.mrf.mxu0
      %v1910 = vadd.f32 0.0, %v1909
      %v1911 = vpop.f32.mrf.mxu0
      %v1912 = vadd.f32 0.0, %v1911
      %1913 = vmatmul.bf16.gmra.mxu0 %v1869
      %v1914 = vpop.f32.mrf.mxu0
      %v1915 = vadd.f32 0.0, %v1914
      %v1916 = vpop.f32.mrf.mxu0
      %v1917 = vadd.f32 0.0, %v1916
      %1918 = vmatmul.bf16.gmra.mxu0 %v1872
      %v1919 = vpop.f32.mrf.mxu0
      %v1920 = vadd.f32 0.0, %v1919
      %v1921 = vpop.f32.mrf.mxu0
      %v1922 = vadd.f32 0.0, %v1921
      %1923 = vmatmul.bf16.gmra.mxu0 %v1875
      %v1924 = vpop.f32.mrf.mxu0
      %v1925 = vadd.f32 0.0, %v1924
      %v1926 = vpop.f32.mrf.mxu0
      %v1927 = vadd.f32 0.0, %v1926
      %1928 = vdwg.mxu0
      %v1929 = vadd.f32 %v1772, %v1890
      %v1930 = vadd.f32 %v1773, %v1892
      %v1931 = vadd.f32 %v1774, %v1895
      %v1932 = vadd.f32 %v1775, %v1897
      %v1933 = vadd.f32 %v1776, %v1900
      %v1934 = vadd.f32 %v1777, %v1902
      %v1935 = vadd.f32 %v1778, %v1905
      %v1936 = vadd.f32 %v1779, %v1907
      %v1937 = vadd.f32 %v1780, %v1910
      %v1938 = vadd.f32 %v1781, %v1912
      %v1939 = vadd.f32 %v1782, %v1915
      %v1940 = vadd.f32 %v1783, %v1917
      %v1941 = vadd.f32 %v1784, %v1920
      %v1942 = vadd.f32 %v1785, %v1922
      %v1943 = vadd.f32 %v1786, %v1925
      %v1944 = vadd.f32 %v1787, %v1927
      %v1945 = vmax.f32 %v1929, 0.0
      %v1946 = vmax.f32 %v1930, 0.0
      %v1947 = vmax.f32 %v1931, 0.0
      %v1948 = vmax.f32 %v1932, 0.0
      %v1949 = vmax.f32 %v1933, 0.0
      %v1950 = vmax.f32 %v1934, 0.0
      %v1951 = vmax.f32 %v1935, 0.0
      %v1952 = vmax.f32 %v1936, 0.0
      %v1953 = vmax.f32 %v1937, 0.0
      %v1954 = vmax.f32 %v1938, 0.0
      %v1955 = vmax.f32 %v1939, 0.0
      %v1956 = vmax.f32 %v1940, 0.0
      %v1957 = vmax.f32 %v1941, 0.0
      %v1958 = vmax.f32 %v1942, 0.0
      %v1959 = vmax.f32 %v1943, 0.0
      %v1960 = vmax.f32 %v1944, 0.0
      %v1961 = vpack.c.bf16 %v1945, %v1945
      %v1962 = vpack.c.bf16 %v1946, %v1946
      %v1963 = vpack.c.bf16 %v1947, %v1947
      %v1964 = vpack.c.bf16 %v1948, %v1948
      %v1965 = vpack.c.bf16 %v1949, %v1949
      %v1966 = vpack.c.bf16 %v1950, %v1950
      %v1967 = vpack.c.bf16 %v1951, %v1951
      %v1968 = vpack.c.bf16 %v1952, %v1952
      %v1969 = vpack.c.bf16 %v1953, %v1953
      %v1970 = vpack.c.bf16 %v1954, %v1954
      %v1971 = vpack.c.bf16 %v1955, %v1955
      %v1972 = vpack.c.bf16 %v1956, %v1956
      %v1973 = vpack.c.bf16 %v1957, %v1957
      %v1974 = vpack.c.bf16 %v1958, %v1958
      %v1975 = vpack.c.bf16 %v1959, %v1959
      %v1976 = vpack.c.bf16 %v1960, %v1960
      %v1977 = vld [vmem:[%s5] sm:$0x3]
      %v1978 = vld [vmem:[%s6] sm:$0x1]
      %v1980 = vperm.slane %v1978, 0
      %v1998 = vunpack.c.l.b16 %v1961
      %v1999 = vunpack.c.l.b16 %v1962
      %v2000 = vunpack.c.l.b16 %v1963
      %v2001 = vunpack.c.l.b16 %v1964
      %v2002 = vunpack.c.l.b16 %v1965
      %v2003 = vunpack.c.l.b16 %v1966
      %v2004 = vunpack.c.l.b16 %v1967
      %v2005 = vunpack.c.l.b16 %v1968
      %v2006 = vunpack.c.l.b16 %v1969
      %v2007 = vunpack.c.l.b16 %v1970
      %v2008 = vunpack.c.l.b16 %v1971
      %v2009 = vunpack.c.l.b16 %v1972
      %v2010 = vunpack.c.l.b16 %v1973
      %v2011 = vunpack.c.l.b16 %v1974
      %v2012 = vunpack.c.l.b16 %v1975
      %v2013 = vunpack.c.l.b16 %v1976
      %v2014 = vpack.c.b16 %v1999, %v1998
      %v2015 = vpack.c.b16 %v2001, %v2000
      %v2016 = vpack.c.b16 %v2003, %v2002
      %v2017 = vpack.c.b16 %v2005, %v2004
      %v2018 = vpack.c.b16 %v2007, %v2006
      %v2019 = vpack.c.b16 %v2009, %v2008
      %v2020 = vpack.c.b16 %v2011, %v2010
      %v2021 = vpack.c.b16 %v2013, %v2012
      %vm2022 = vcmask 31744
      %v2024 = vsel %vm2022, %v2014, 0
      %v2027 = vsel %vm2022, %v2015, 0
      %v2030 = vsel %vm2022, %v2016, 0
      %v2033 = vsel %vm2022, %v2017, 0
      %v2036 = vsel %vm2022, %v2018, 0
      %v2039 = vsel %vm2022, %v2019, 0
      %v2042 = vsel %vm2022, %v2020, 0
      %v2045 = vsel %vm2022, %v2021, 0
      %vm2047 = vcmask 1041408
      %v2049 = vsel %vm2047, %v1977, 0
      %2051 = vmatpush.bf16.msra.mxu0 0
      %2052 = vmatpush.bf16.msra.mxu0 0
      %2053 = vmatpush.bf16.msra.mxu0 0
      %2054 = vmatpush.bf16.msra.mxu0 0
      %2055 = vmatpush.bf16.msra.mxu0 0
      %2056 = vmatpush.bf16.msra.mxu0 0
      %2057 = vmatpush.bf16.msra.mxu0 0
      %2058 = vmatpush.bf16.msra.mxu0 %v2049
      %2059 = vmatmul.bf16.gmra.mxu0 %v2024
      %v2060 = vpop.f32.mrf.mxu0
      %v2061 = vadd.f32 %v1980, %v2060
      %v2062 = vpop.f32.mrf.mxu0
      %v2063 = vadd.f32 %v1980, %v2062
      %2064 = vmatmul.bf16.gmra.mxu0 %v2027
      %v2065 = vpop.f32.mrf.mxu0
      %v2066 = vadd.f32 %v1980, %v2065
      %v2067 = vpop.f32.mrf.mxu0
      %v2068 = vadd.f32 %v1980, %v2067
      %2069 = vmatmul.bf16.gmra.mxu0 %v2030
      %v2070 = vpop.f32.mrf.mxu0
      %v2071 = vadd.f32 %v1980, %v2070
      %v2072 = vpop.f32.mrf.mxu0
      %v2073 = vadd.f32 %v1980, %v2072
      %2074 = vmatmul.bf16.gmra.mxu0 %v2033
      %v2075 = vpop.f32.mrf.mxu0
      %v2076 = vadd.f32 %v1980, %v2075
      %v2077 = vpop.f32.mrf.mxu0
      %v2078 = vadd.f32 %v1980, %v2077
      %2079 = vmatmul.bf16.gmra.mxu0 %v2036
      %v2080 = vpop.f32.mrf.mxu0
      %v2081 = vadd.f32 %v1980, %v2080
      %v2082 = vpop.f32.mrf.mxu0
      %v2083 = vadd.f32 %v1980, %v2082
      %2084 = vmatmul.bf16.gmra.mxu0 %v2039
      %v2085 = vpop.f32.mrf.mxu0
      %v2086 = vadd.f32 %v1980, %v2085
      %v2087 = vpop.f32.mrf.mxu0
      %v2088 = vadd.f32 %v1980, %v2087
      %2089 = vmatmul.bf16.gmra.mxu0 %v2042
      %v2090 = vpop.f32.mrf.mxu0
      %v2091 = vadd.f32 %v1980, %v2090
      %v2092 = vpop.f32.mrf.mxu0
      %v2093 = vadd.f32 %v1980, %v2092
      %2094 = vmatmul.bf16.gmra.mxu0 %v2045
      %v2095 = vpop.f32.mrf.mxu0
      %v2096 = vadd.f32 %v1980, %v2095
      %v2097 = vpop.f32.mrf.mxu0
      %v2098 = vadd.f32 %v1980, %v2097
      %2099 = vdwg.mxu0
      %v2100 = vld [vmem:[%s400] sm:$0xff]
      %v2101 = vld [vmem:[%s400 + $0x8] sm:$0xff]
      %v2102 = vld [vmem:[%s400 + $0x10] sm:$0xff]
      %v2103 = vld [vmem:[%s400 + $0x18] sm:$0xff]
      %v2104 = vld [vmem:[%s400 + $0x20] sm:$0xff]
      %v2105 = vld [vmem:[%s400 + $0x28] sm:$0xff]
      %v2106 = vld [vmem:[%s400 + $0x30] sm:$0xff]
      %v2107 = vld [vmem:[%s400 + $0x38] sm:$0xff]
      %v2108 = vld [vmem:[%s400 + $0x40] sm:$0xff]
      %v2109 = vld [vmem:[%s400 + $0x48] sm:$0xff]
      %v2110 = vld [vmem:[%s400 + $0x50] sm:$0xff]
      %v2111 = vld [vmem:[%s400 + $0x58] sm:$0xff]
      %v2112 = vld [vmem:[%s400 + $0x60] sm:$0xff]
      %v2113 = vld [vmem:[%s400 + $0x68] sm:$0xff]
      %v2114 = vld [vmem:[%s400 + $0x70] sm:$0xff]
      %v2115 = vld [vmem:[%s400 + $0x78] sm:$0xff]
      %v2116 = vadd.f32 %v2061, %v2100
      %v2117 = vadd.f32 %v2063, %v2101
      %v2118 = vadd.f32 %v2066, %v2102
      %v2119 = vadd.f32 %v2068, %v2103
      %v2120 = vadd.f32 %v2071, %v2104
      %v2121 = vadd.f32 %v2073, %v2105
      %v2122 = vadd.f32 %v2076, %v2106
      %v2123 = vadd.f32 %v2078, %v2107
      %v2124 = vadd.f32 %v2081, %v2108
      %v2125 = vadd.f32 %v2083, %v2109
      %v2126 = vadd.f32 %v2086, %v2110
      %v2127 = vadd.f32 %v2088, %v2111
      %v2128 = vadd.f32 %v2091, %v2112
      %v2129 = vadd.f32 %v2093, %v2113
      %v2130 = vadd.f32 %v2096, %v2114
      %v2131 = vadd.f32 %v2098, %v2115
      %2132 = vst.msk [vmem:[%s445] sm:$0xff] %vm2022, %v2116
      %2133 = vst.msk [vmem:[%s445 + $0x8] sm:$0xff] %vm2022, %v2117
      %2134 = vst.msk [vmem:[%s445 + $0x10] sm:$0xff] %vm2022, %v2118
      %2135 = vst.msk [vmem:[%s445 + $0x18] sm:$0xff] %vm2022, %v2119
      %2136 = vst.msk [vmem:[%s445 + $0x20] sm:$0xff] %vm2022, %v2120
      %2137 = vst.msk [vmem:[%s445 + $0x28] sm:$0xff] %vm2022, %v2121
      %2138 = vst.msk [vmem:[%s445 + $0x30] sm:$0xff] %vm2022, %v2122
      %2139 = vst.msk [vmem:[%s445 + $0x38] sm:$0xff] %vm2022, %v2123
      %2140 = vst.msk [vmem:[%s445 + $0x40] sm:$0xff] %vm2022, %v2124
      %2141 = vst.msk [vmem:[%s445 + $0x48] sm:$0xff] %vm2022, %v2125
      %2142 = vst.msk [vmem:[%s445 + $0x50] sm:$0xff] %vm2022, %v2126
      %2143 = vst.msk [vmem:[%s445 + $0x58] sm:$0xff] %vm2022, %v2127
      %2144 = vst.msk [vmem:[%s445 + $0x60] sm:$0xff] %vm2022, %v2128
      %2145 = vst.msk [vmem:[%s445 + $0x68] sm:$0xff] %vm2022, %v2129
      %2146 = vst.msk [vmem:[%s445 + $0x70] sm:$0xff] %vm2022, %v2130
      %2147 = vst.msk [vmem:[%s445 + $0x78] sm:$0xff] %vm2022, %v2131
      %s2148 = smul.u32 8, %s23
      %p2149 = scmp.lt.s32.totalorder %s22, 1
      %s2150 = scalar_select %p2149, %s22, 1
      %p2151 = scmp.lt.s32.totalorder %s2148, 15
      %s2152 = scalar_select %p2151, %s2148, 15
      %s2153 = smul.addr %s2152, 2
      %s2154 = smul.addr %s2150, 32
      %s2155 = sadd.s32 %s2153, %s2154
      %s2156 = smul.addr %s2155, 8
      %s2157 = scalar_lea.vmem %s7, %s2156
      // Predicated region
      $region49: #{residual_block.1} parent=47 // pred_check
        %p2158 = pneg %p234
      $region50: #{residual_block.1} parent=47 // pred_check_branch
        %2160 = sbr.rel (%p2158) target = $region52
      $region51: #{residual_block.1} parent=47 // pred_region
        %s2161 = smul.u32 8, %s23
      $region52: #{residual_block.1} parent=47 // pred_fallthru
        _
    $region48: #{residual_block.1} parent=5 // pred_fallthru
      _
    %p2162 = scmp.le.s32.totalorder 2, %s13
    // Predicated region
    $region53: #{residual_block.1} parent=5 // pred_check
      %p2163 = pneg %p2162
    $region54: #{residual_block.1} parent=5 // pred_check_branch
      %2165 = sbr.rel (%p2163) target = $region56
    $region55: #{residual_block.1} parent=5 // pred_region
      %s2166 = ssub.s32 %s13, 2
      // Predicated region
      $region57: #{residual_block.1} parent=55 // pred_check
        %p2167 = pneg %p240
      $region58: #{residual_block.1} parent=55 // pred_check_branch
        %2169 = sbr.rel (%p2167) target = $region60
      $region59: #{residual_block.1} parent=55 // pred_region
        %s2170 = smul.u32 8, %s25
        %p2171 = scmp.lt.s32.totalorder %s24, 1
        %s2172 = scalar_select %p2171, %s24, 1
        %p2173 = scmp.lt.s32.totalorder %s2170, 15
        %s2174 = scalar_select %p2173, %s2170, 15
        %s2175 = smul.addr %s2174, 2
        %s2176 = smul.addr %s2172, 32
        %s2177 = sadd.s32 %s2175, %s2176
        %s2178 = smul.addr %s2177, 8
        %s2179 = scalar_lea.vmem %s7, %s2178
      $region60: #{residual_block.1} parent=55 // pred_fallthru
        _
    $region56: #{residual_block.1} parent=5 // pred_fallthru
      _
  $region6: #{residual_block.1} parent=0 // loop_footer
    %s17 = sadd.s32 1, %s13
  $region7: #{residual_block.1} parent=0 // loop_footer_branch
    %12 = sbr.rel target = $region3
  $region8: #{residual_block.1} parent=0 // loop_exit
    _

</llo_original>
